<compile_context>
chip_gen: v6e
topology: v6e:2x2x1
jax: 0.10.0
libtpu: 0.0.40
codegen_flags: <defaults>
</compile_context>

<pallas_src>
import jax
import jax.numpy as jnp
from jax.experimental import pallas as pl
from jax.experimental.pallas import tpu as pltpu

RES_FEAT = 512          # stub ResNet50-3D + Linformer feature width
SURV_FEAT = 247         # stub DeepSurv_1dcnn feature width (512 + 247 = 759)
SURV_PAD = 256          # zero-padded to a lane-aligned multiple of 128
CONV1D_CH = 8
CONV1D_K = 3
N_VOL_BLOCKS = 4        # t + 3 patches feed the (4*C -> 512) dense


# ----------------------------------------------------------------- kernel ---
def _fused_kernel(t_ref,        # (B, C, St)            volume, spatial flattened
                  p_ref,        # (3, B, C, Sp)         patches stacked
                  tab_ref,      # (3, B, T)             [x[t-1], x[t], x[t+1]]
                  res_w_ref,    # (4, C, 512)           dense weight, per block
                  res_bw_ref,   # (2, 512)              [res_bias ; head_w_res]
                  surv_ref,     # (10, 256)             [surv_w(8) ; surv_b ; head_w_surv]
                  scal_ref,     # SMEM (33,)            conv_w(24) + conv_b(8) + head_b
                  o_ref):       # (B, 1)
    f32 = jnp.float32

    # ---- ResNet-Linformer stub branch: GAP per channel -> dense -> ReLU -----
    # TODO(synk): generate_model_BraTS_LF (3-D ResNet-50 + Linformer) internals
    # are not in the provided source; replaced by GAP -> Linear(4*C,512)+ReLU.
    res_pre = res_bw_ref[0:1, :]                               # bias, (1, 512)
    g_t = jnp.mean(t_ref[...], axis=-1)                        # (B, C)
    res_pre = res_pre + jnp.dot(g_t, res_w_ref[0],
                                preferred_element_type=f32)
    for k in range(3):                                         # patches 0..2
        g_p = jnp.mean(p_ref[k], axis=-1)                      # (B, C)
        res_pre = res_pre + jnp.dot(g_p, res_w_ref[k + 1],
                                    preferred_element_type=f32)
    res_out = jnp.maximum(res_pre, 0.0)                        # (B, 512)

    # ---- DeepSurv stub branch: 3-tap conv on VPU + ReLU + GAP + dense 8->256
    # TODO(synk): DeepSurv_1dcnn internals are not in the provided source;
    # replaced by conv1d(k=3,pad=1,8ch)+ReLU+GAP+Linear(8,247)+ReLU.
    xl = tab_ref[0]                                            # x[t-1] (zero padded)
    xc = tab_ref[1]                                            # x[t]
    xr = tab_ref[2]                                            # x[t+1] (zero padded)
    surv_pre = surv_ref[CONV1D_CH:CONV1D_CH + 1, :]            # surv bias (1, 256)
    for c in range(CONV1D_CH):                                 # static unroll, VPU only
        yc = (scal_ref[0 * CONV1D_CH + c] * xl
              + scal_ref[1 * CONV1D_CH + c] * xc
              + scal_ref[2 * CONV1D_CH + c] * xr
              + scal_ref[3 * CONV1D_CH + c])                   # conv bias
        yc = jnp.maximum(yc, 0.0)                              # (B, T)
        gc = jnp.mean(yc, axis=-1, keepdims=True)              # (B, 1)  GAP over T
        # fold the 8->256 dense in as broadcast FMAs (no K=8 matmul)
        surv_pre = surv_pre + gc * surv_ref[c:c + 1, :]        # (B, 256)
    surv_out = jnp.maximum(surv_pre, 0.0)                      # (B, 256) (pad cols = 0)

    # ---- Head: tanh(concat([res, surv]) @ W + b) as VPU mul + lane reduction
    h = jnp.sum(res_out * res_bw_ref[1:2, :], axis=-1, keepdims=True)       # (B, 1)
    h = h + jnp.sum(surv_out * surv_ref[CONV1D_CH + 1:CONV1D_CH + 2, :],
                    axis=-1, keepdims=True)
    h = h + scal_ref[4 * CONV1D_CH]                            # head bias scalar
    o_ref[...] = jnp.tanh(h).astype(o_ref.dtype)


# ---------------------------------------------------------------- wrapper ---
def fused_forward(fp, t3, patches, tab3):
    B, C, St = t3.shape
    Sp = patches.shape[-1]
    T = tab3.shape[-1]

    def full(shape):
        return pl.BlockSpec(shape, lambda i, _n=len(shape): (0,) * _n)

    smem = pl.BlockSpec(memory_space=pltpu.MemorySpace.SMEM)

    return pl.pallas_call(
        _fused_kernel,
        out_shape=jax.ShapeDtypeStruct((B, 1), jnp.float32),
        grid=(1,),
        in_specs=[
            full((B, C, St)),
            full((3, B, C, Sp)),
            full((3, B, T)),
            full((N_VOL_BLOCKS, C, RES_FEAT)),
            full((2, RES_FEAT)),
            full((CONV1D_CH + 2, SURV_PAD)),
            smem,                                    # packed conv / head scalars
        ],
        out_specs=pl.BlockSpec((B, 1), lambda i: (0, 0)),
        compiler_params=pltpu.CompilerParams(
            dimension_semantics=("arbitrary",)),
    )(t3, patches, tab3, fp["res_w"], fp["res_bw"], fp["surv"], fp["scal"])


# ------------------------------------------------------------- parameters ---
def xavier_normal(key, shape):
    fan_in, fan_out = shape
    std = (2.0 / (fan_in + fan_out)) ** 0.5
    return std * jax.random.normal(key, shape, dtype=jnp.float32)


def kaiming_normal(key, shape, fan_out):
    std = (2.0 / fan_out) ** 0.5
    return std * jax.random.normal(key, shape, dtype=jnp.float32)


def init_params(key, c_in):
    ks = jax.random.split(key, 4)
    p = {}
    p["res_w"] = xavier_normal(ks[0], (4 * c_in, RES_FEAT))
    p["res_b"] = jnp.zeros((RES_FEAT,), jnp.float32)
    p["conv_w"] = kaiming_normal(ks[1], (CONV1D_K, CONV1D_CH),
                                 fan_out=CONV1D_CH * CONV1D_K)
    p["conv_b"] = jnp.zeros((CONV1D_CH,), jnp.float32)
    p["surv_w"] = xavier_normal(ks[2], (CONV1D_CH, SURV_FEAT))
    p["surv_b"] = jnp.zeros((SURV_FEAT,), jnp.float32)
    # Head defined in the module: nn.Linear(759, 1), xavier_normal_ init.
    p["head_w"] = xavier_normal(ks[3], (RES_FEAT + SURV_FEAT, 1))
    p["head_b"] = jnp.zeros((1,), jnp.float32)
    return p


def prepare_params(p):
    """Pack parameters into lane-aligned, stacked kernel operands (7 inputs)."""
    pad = SURV_PAD - SURV_FEAT
    c_in = p["res_w"].shape[0] // N_VOL_BLOCKS
    fp = {}
    # (4*C, 512) -> (4, C, 512): each block is an aligned first-axis load.
    fp["res_w"] = p["res_w"].reshape(N_VOL_BLOCKS, c_in, RES_FEAT)
    # row 0 = res bias, row 1 = head weight for the res features.
    fp["res_bw"] = jnp.stack([p["res_b"], p["head_w"][:RES_FEAT, 0]], axis=0)
    # rows 0..7 = surv_w, row 8 = surv bias, row 9 = head weight for surv feats.
    surv_w_pad = jnp.pad(p["surv_w"], ((0, 0), (0, pad)))
    surv_b_pad = jnp.pad(p["surv_b"], (0, pad))[None, :]
    hw_surv_pad = jnp.pad(p["head_w"][RES_FEAT:, 0], (0, pad))[None, :]
    fp["surv"] = jnp.concatenate([surv_w_pad, surv_b_pad, hw_surv_pad], axis=0)
    # All scalars in one SMEM vector: conv_w (k-major, 24) + conv_b (8) + head_b.
    fp["scal"] = jnp.concatenate(
        [p["conv_w"].reshape(-1), p["conv_b"], p["head_b"]])
    return fp


# ----------------------------------------------------------------- forward --
def forward(fparams, t, n_patch0, n_patch1, n_patch2, tabular_data):
    B, C = t.shape[:2]
    # Flatten spatial dims; GAP happens inside the fused kernel.
    t3 = t.reshape(B, C, -1)
    patches = jnp.stack([n_patch0.reshape(B, C, -1),
                         n_patch1.reshape(B, C, -1),
                         n_patch2.reshape(B, C, -1)], axis=0)    # (3, B, C, Sp)
    # Tabular: pre-shifted views for the 3-tap conv (zero 'same' padding),
    # stacked into a single operand so the kernel gets one DMA for all taps.
    x = tabular_data[:, 0, :]                                    # (B, T)
    T = x.shape[-1]
    zero = jnp.zeros((B, 1), x.dtype)
    xl = jnp.concatenate([zero, x[:, :T - 1]], axis=1)           # x[t-1]
    xr = jnp.concatenate([x[:, 1:], zero], axis=1)               # x[t+1]
    tab3 = jnp.stack([xl, x, xr], axis=0)                        # (3, B, T)
    return fused_forward(fparams, t3, patches, tab3)


# --------------------------------------------------------------------- main --
if __name__ == "__main__":
    key = jax.random.PRNGKey(0)
    k_t, k_p0, k_p1, k_p2, k_tab, k_par = jax.random.split(key, 6)

    B, C = 2, 4
    t = jax.random.normal(k_t, (B, C, 8, 8, 8), dtype=jnp.float32)
    n_patch0 = jax.random.normal(k_p0, (B, C, 4, 4, 4), dtype=jnp.float32)
    n_patch1 = jax.random.normal(k_p1, (B, C, 4, 4, 4), dtype=jnp.float32)
    n_patch2 = jax.random.normal(k_p2, (B, C, 4, 4, 4), dtype=jnp.float32)
    tabular_data = jax.random.normal(k_tab, (B, 1, 16), dtype=jnp.float32)

    fparams = prepare_params(init_params(k_par, C))

    out = forward(fparams, t, n_patch0, n_patch1, n_patch2, tabular_data)
    out = jax.block_until_ready(out)
    assert out.shape == (B, 1) and out.dtype == jnp.float32
    assert bool(jnp.all(jnp.isfinite(out))) and bool(jnp.all(jnp.abs(out) <= 1.0))
    print("KERNEL_OK")
</pallas_src>

<mosaic_0001>
module attributes {stable_mosaic.version = 11 : i64} {
  func.func @_fused_kernel(%arg0: i32, %arg1: memref<2x4x512xf32, #tpu.memory_space<vmem>>, %arg2: memref<3x2x4x64xf32, #tpu.memory_space<vmem>>, %arg3: memref<3x2x16xf32, #tpu.memory_space<vmem>>, %arg4: memref<4x4x512xf32, #tpu.memory_space<vmem>>, %arg5: memref<2x512xf32, #tpu.memory_space<vmem>>, %arg6: memref<10x256xf32, #tpu.memory_space<vmem>>, %arg7: memref<33xf32, #tpu.memory_space<smem>>, %arg8: memref<2x1xf32, #tpu.memory_space<vmem>>) attributes {dimension_semantics = [#tpu.dimension_semantics<arbitrary>], iteration_bounds = array<i64: 1>, scalar_prefetch = 0 : i64, scratch_operands = 0 : i64, tpu.core_type = #tpu.core_type<tc>, window_params = [{pipeline_mode = #tpu.pipeline_mode<synchronous>, transform_indices = @transform_0, window_bounds = array<i64: 2, 4, 512>}, {pipeline_mode = #tpu.pipeline_mode<synchronous>, transform_indices = @transform_1, window_bounds = array<i64: 3, 2, 4, 64>}, {pipeline_mode = #tpu.pipeline_mode<synchronous>, transform_indices = @transform_2, window_bounds = array<i64: 3, 2, 16>}, {pipeline_mode = #tpu.pipeline_mode<synchronous>, transform_indices = @transform_3, window_bounds = array<i64: 4, 4, 512>}, {pipeline_mode = #tpu.pipeline_mode<synchronous>, transform_indices = @transform_4, window_bounds = array<i64: 2, 512>}, {pipeline_mode = #tpu.pipeline_mode<synchronous>, transform_indices = @transform_5, window_bounds = array<i64: 10, 256>}, {transform_indices = @transform_6, window_bounds = array<i64: 33>}, {pipeline_mode = #tpu.pipeline_mode<synchronous>, transform_indices = @transform_7, window_bounds = array<i64: 2, 1>}]} {
    %c0 = arith.constant 0 : index
    %c0_0 = arith.constant 0 : index
    %0 = vector.load %arg5[%c0, %c0_0] : memref<2x512xf32, #tpu.memory_space<vmem>>, vector<1x512xf32>
    %c0_1 = arith.constant 0 : index
    %c0_2 = arith.constant 0 : index
    %c0_3 = arith.constant 0 : index
    %1 = vector.load %arg1[%c0_1, %c0_2, %c0_3] : memref<2x4x512xf32, #tpu.memory_space<vmem>>, vector<2x4x512xf32>
    %cst = arith.constant dense<0.000000e+00> : vector<2x4xf32>
    %2 = vector.multi_reduction <add>, %1, %cst [2] : vector<2x4x512xf32> to vector<2x4xf32>
    %cst_4 = arith.constant 5.120000e+02 : f32
    %3 = vector.broadcast %cst_4 : f32 to vector<2x4xf32>
    %4 = arith.divf %2, %3 : vector<2x4xf32>
    %c0_5 = arith.constant 0 : index
    %c0_6 = arith.constant 0 : index
    %c0_7 = arith.constant 0 : index
    %5 = vector.load %arg4[%c0_5, %c0_6, %c0_7] : memref<4x4x512xf32, #tpu.memory_space<vmem>>, vector<1x4x512xf32>
    %6 = vector.shape_cast %5 : vector<1x4x512xf32> to vector<4x512xf32>
    %cst_8 = arith.constant dense<0.000000e+00> : vector<2x512xf32>
    %7 = tpu.matmul %4, %6, %cst_8 {dimension_numbers = #tpu.dot_dimension_numbers<[1], [0], [0], [1], [0, 0, 1, 1], [], []>} : vector<2x4xf32>, vector<4x512xf32>, vector<2x512xf32> -> vector<2x512xf32>
    %8 = vector.broadcast %0 : vector<1x512xf32> to vector<2x512xf32>
    %9 = arith.addf %8, %7 : vector<2x512xf32>
    %c0_9 = arith.constant 0 : index
    %c0_10 = arith.constant 0 : index
    %c0_11 = arith.constant 0 : index
    %c0_12 = arith.constant 0 : index
    %10 = vector.load %arg2[%c0_9, %c0_10, %c0_11, %c0_12] : memref<3x2x4x64xf32, #tpu.memory_space<vmem>>, vector<1x2x4x64xf32>
    %11 = vector.shape_cast %10 : vector<1x2x4x64xf32> to vector<2x4x64xf32>
    %cst_13 = arith.constant dense<0.000000e+00> : vector<2x4xf32>
    %12 = vector.multi_reduction <add>, %11, %cst_13 [2] : vector<2x4x64xf32> to vector<2x4xf32>
    %cst_14 = arith.constant 6.400000e+01 : f32
    %13 = vector.broadcast %cst_14 : f32 to vector<2x4xf32>
    %14 = arith.divf %12, %13 : vector<2x4xf32>
    %c1 = arith.constant 1 : index
    %c0_15 = arith.constant 0 : index
    %c0_16 = arith.constant 0 : index
    %15 = vector.load %arg4[%c1, %c0_15, %c0_16] : memref<4x4x512xf32, #tpu.memory_space<vmem>>, vector<1x4x512xf32>
    %16 = vector.shape_cast %15 : vector<1x4x512xf32> to vector<4x512xf32>
    %cst_17 = arith.constant dense<0.000000e+00> : vector<2x512xf32>
    %17 = tpu.matmul %14, %16, %cst_17 {dimension_numbers = #tpu.dot_dimension_numbers<[1], [0], [0], [1], [0, 0, 1, 1], [], []>} : vector<2x4xf32>, vector<4x512xf32>, vector<2x512xf32> -> vector<2x512xf32>
    %18 = arith.addf %9, %17 : vector<2x512xf32>
    %c1_18 = arith.constant 1 : index
    %c0_19 = arith.constant 0 : index
    %c0_20 = arith.constant 0 : index
    %c0_21 = arith.constant 0 : index
    %19 = vector.load %arg2[%c1_18, %c0_19, %c0_20, %c0_21] : memref<3x2x4x64xf32, #tpu.memory_space<vmem>>, vector<1x2x4x64xf32>
    %20 = vector.shape_cast %19 : vector<1x2x4x64xf32> to vector<2x4x64xf32>
    %cst_22 = arith.constant dense<0.000000e+00> : vector<2x4xf32>
    %21 = vector.multi_reduction <add>, %20, %cst_22 [2] : vector<2x4x64xf32> to vector<2x4xf32>
    %cst_23 = arith.constant 6.400000e+01 : f32
    %22 = vector.broadcast %cst_23 : f32 to vector<2x4xf32>
    %23 = arith.divf %21, %22 : vector<2x4xf32>
    %c2 = arith.constant 2 : index
    %c0_24 = arith.constant 0 : index
    %c0_25 = arith.constant 0 : index
    %24 = vector.load %arg4[%c2, %c0_24, %c0_25] : memref<4x4x512xf32, #tpu.memory_space<vmem>>, vector<1x4x512xf32>
    %25 = vector.shape_cast %24 : vector<1x4x512xf32> to vector<4x512xf32>
    %cst_26 = arith.constant dense<0.000000e+00> : vector<2x512xf32>
    %26 = tpu.matmul %23, %25, %cst_26 {dimension_numbers = #tpu.dot_dimension_numbers<[1], [0], [0], [1], [0, 0, 1, 1], [], []>} : vector<2x4xf32>, vector<4x512xf32>, vector<2x512xf32> -> vector<2x512xf32>
    %27 = arith.addf %18, %26 : vector<2x512xf32>
    %c2_27 = arith.constant 2 : index
    %c0_28 = arith.constant 0 : index
    %c0_29 = arith.constant 0 : index
    %c0_30 = arith.constant 0 : index
    %28 = vector.load %arg2[%c2_27, %c0_28, %c0_29, %c0_30] : memref<3x2x4x64xf32, #tpu.memory_space<vmem>>, vector<1x2x4x64xf32>
    %29 = vector.shape_cast %28 : vector<1x2x4x64xf32> to vector<2x4x64xf32>
    %cst_31 = arith.constant dense<0.000000e+00> : vector<2x4xf32>
    %30 = vector.multi_reduction <add>, %29, %cst_31 [2] : vector<2x4x64xf32> to vector<2x4xf32>
    %cst_32 = arith.constant 6.400000e+01 : f32
    %31 = vector.broadcast %cst_32 : f32 to vector<2x4xf32>
    %32 = arith.divf %30, %31 : vector<2x4xf32>
    %c3 = arith.constant 3 : index
    %c0_33 = arith.constant 0 : index
    %c0_34 = arith.constant 0 : index
    %33 = vector.load %arg4[%c3, %c0_33, %c0_34] : memref<4x4x512xf32, #tpu.memory_space<vmem>>, vector<1x4x512xf32>
    %34 = vector.shape_cast %33 : vector<1x4x512xf32> to vector<4x512xf32>
    %cst_35 = arith.constant dense<0.000000e+00> : vector<2x512xf32>
    %35 = tpu.matmul %32, %34, %cst_35 {dimension_numbers = #tpu.dot_dimension_numbers<[1], [0], [0], [1], [0, 0, 1, 1], [], []>} : vector<2x4xf32>, vector<4x512xf32>, vector<2x512xf32> -> vector<2x512xf32>
    %36 = arith.addf %27, %35 : vector<2x512xf32>
    %cst_36 = arith.constant 0.000000e+00 : f32
    %37 = vector.broadcast %cst_36 : f32 to vector<2x512xf32>
    %38 = arith.maximumf %36, %37 : vector<2x512xf32>
    %c0_37 = arith.constant 0 : index
    %c0_38 = arith.constant 0 : index
    %c0_39 = arith.constant 0 : index
    %39 = vector.load %arg3[%c0_37, %c0_38, %c0_39] : memref<3x2x16xf32, #tpu.memory_space<vmem>>, vector<1x2x16xf32>
    %40 = vector.shape_cast %39 : vector<1x2x16xf32> to vector<2x16xf32>
    %c1_40 = arith.constant 1 : index
    %c0_41 = arith.constant 0 : index
    %c0_42 = arith.constant 0 : index
    %41 = vector.load %arg3[%c1_40, %c0_41, %c0_42] : memref<3x2x16xf32, #tpu.memory_space<vmem>>, vector<1x2x16xf32>
    %42 = vector.shape_cast %41 : vector<1x2x16xf32> to vector<2x16xf32>
    %c2_43 = arith.constant 2 : index
    %c0_44 = arith.constant 0 : index
    %c0_45 = arith.constant 0 : index
    %43 = vector.load %arg3[%c2_43, %c0_44, %c0_45] : memref<3x2x16xf32, #tpu.memory_space<vmem>>, vector<1x2x16xf32>
    %44 = vector.shape_cast %43 : vector<1x2x16xf32> to vector<2x16xf32>
    %c8 = arith.constant 8 : index
    %c0_46 = arith.constant 0 : index
    %45 = vector.load %arg6[%c8, %c0_46] : memref<10x256xf32, #tpu.memory_space<vmem>>, vector<1x256xf32>
    %c0_47 = arith.constant 0 : index
    %46 = memref.load %arg7[%c0_47] : memref<33xf32, #tpu.memory_space<smem>>
    %47 = vector.broadcast %46 : f32 to vector<2x16xf32>
    %48 = arith.mulf %47, %40 : vector<2x16xf32>
    %c8_48 = arith.constant 8 : index
    %49 = memref.load %arg7[%c8_48] : memref<33xf32, #tpu.memory_space<smem>>
    %50 = vector.broadcast %49 : f32 to vector<2x16xf32>
    %51 = arith.mulf %50, %42 : vector<2x16xf32>
    %52 = arith.addf %48, %51 : vector<2x16xf32>
    %c16 = arith.constant 16 : index
    %53 = memref.load %arg7[%c16] : memref<33xf32, #tpu.memory_space<smem>>
    %54 = vector.broadcast %53 : f32 to vector<2x16xf32>
    %55 = arith.mulf %54, %44 : vector<2x16xf32>
    %56 = arith.addf %52, %55 : vector<2x16xf32>
    %c24 = arith.constant 24 : index
    %57 = memref.load %arg7[%c24] : memref<33xf32, #tpu.memory_space<smem>>
    %58 = vector.broadcast %57 : f32 to vector<2x16xf32>
    %59 = arith.addf %56, %58 : vector<2x16xf32>
    %cst_49 = arith.constant 0.000000e+00 : f32
    %60 = vector.broadcast %cst_49 : f32 to vector<2x16xf32>
    %61 = arith.maximumf %59, %60 : vector<2x16xf32>
    %cst_50 = arith.constant dense<0.000000e+00> : vector<2xf32>
    %62 = vector.multi_reduction <add>, %61, %cst_50 [1] : vector<2x16xf32> to vector<2xf32>
    %63 = vector.shape_cast %62 : vector<2xf32> to vector<2x1xf32>
    %cst_51 = arith.constant 1.600000e+01 : f32
    %64 = vector.broadcast %cst_51 : f32 to vector<2x1xf32>
    %65 = arith.divf %63, %64 : vector<2x1xf32>
    %c0_52 = arith.constant 0 : index
    %c0_53 = arith.constant 0 : index
    %66 = vector.load %arg6[%c0_52, %c0_53] : memref<10x256xf32, #tpu.memory_space<vmem>>, vector<1x256xf32>
    %67 = vector.broadcast %65 : vector<2x1xf32> to vector<2x256xf32>
    %68 = vector.broadcast %66 : vector<1x256xf32> to vector<2x256xf32>
    %69 = arith.mulf %67, %68 : vector<2x256xf32>
    %70 = vector.broadcast %45 : vector<1x256xf32> to vector<2x256xf32>
    %71 = arith.addf %70, %69 : vector<2x256xf32>
    %c1_54 = arith.constant 1 : index
    %72 = memref.load %arg7[%c1_54] : memref<33xf32, #tpu.memory_space<smem>>
    %73 = vector.broadcast %72 : f32 to vector<2x16xf32>
    %74 = arith.mulf %73, %40 : vector<2x16xf32>
    %c9 = arith.constant 9 : index
    %75 = memref.load %arg7[%c9] : memref<33xf32, #tpu.memory_space<smem>>
    %76 = vector.broadcast %75 : f32 to vector<2x16xf32>
    %77 = arith.mulf %76, %42 : vector<2x16xf32>
    %78 = arith.addf %74, %77 : vector<2x16xf32>
    %c17 = arith.constant 17 : index
    %79 = memref.load %arg7[%c17] : memref<33xf32, #tpu.memory_space<smem>>
    %80 = vector.broadcast %79 : f32 to vector<2x16xf32>
    %81 = arith.mulf %80, %44 : vector<2x16xf32>
    %82 = arith.addf %78, %81 : vector<2x16xf32>
    %c25 = arith.constant 25 : index
    %83 = memref.load %arg7[%c25] : memref<33xf32, #tpu.memory_space<smem>>
    %84 = vector.broadcast %83 : f32 to vector<2x16xf32>
    %85 = arith.addf %82, %84 : vector<2x16xf32>
    %cst_55 = arith.constant 0.000000e+00 : f32
    %86 = vector.broadcast %cst_55 : f32 to vector<2x16xf32>
    %87 = arith.maximumf %85, %86 : vector<2x16xf32>
    %cst_56 = arith.constant dense<0.000000e+00> : vector<2xf32>
    %88 = vector.multi_reduction <add>, %87, %cst_56 [1] : vector<2x16xf32> to vector<2xf32>
    %89 = vector.shape_cast %88 : vector<2xf32> to vector<2x1xf32>
    %cst_57 = arith.constant 1.600000e+01 : f32
    %90 = vector.broadcast %cst_57 : f32 to vector<2x1xf32>
    %91 = arith.divf %89, %90 : vector<2x1xf32>
    %c1_58 = arith.constant 1 : index
    %c0_59 = arith.constant 0 : index
    %92 = vector.load %arg6[%c1_58, %c0_59] : memref<10x256xf32, #tpu.memory_space<vmem>>, vector<1x256xf32>
    %93 = vector.broadcast %91 : vector<2x1xf32> to vector<2x256xf32>
    %94 = vector.broadcast %92 : vector<1x256xf32> to vector<2x256xf32>
    %95 = arith.mulf %93, %94 : vector<2x256xf32>
    %96 = arith.addf %71, %95 : vector<2x256xf32>
    %c2_60 = arith.constant 2 : index
    %97 = memref.load %arg7[%c2_60] : memref<33xf32, #tpu.memory_space<smem>>
    %98 = vector.broadcast %97 : f32 to vector<2x16xf32>
    %99 = arith.mulf %98, %40 : vector<2x16xf32>
    %c10 = arith.constant 10 : index
    %100 = memref.load %arg7[%c10] : memref<33xf32, #tpu.memory_space<smem>>
    %101 = vector.broadcast %100 : f32 to vector<2x16xf32>
    %102 = arith.mulf %101, %42 : vector<2x16xf32>
    %103 = arith.addf %99, %102 : vector<2x16xf32>
    %c18 = arith.constant 18 : index
    %104 = memref.load %arg7[%c18] : memref<33xf32, #tpu.memory_space<smem>>
    %105 = vector.broadcast %104 : f32 to vector<2x16xf32>
    %106 = arith.mulf %105, %44 : vector<2x16xf32>
    %107 = arith.addf %103, %106 : vector<2x16xf32>
    %c26 = arith.constant 26 : index
    %108 = memref.load %arg7[%c26] : memref<33xf32, #tpu.memory_space<smem>>
    %109 = vector.broadcast %108 : f32 to vector<2x16xf32>
    %110 = arith.addf %107, %109 : vector<2x16xf32>
    %cst_61 = arith.constant 0.000000e+00 : f32
    %111 = vector.broadcast %cst_61 : f32 to vector<2x16xf32>
    %112 = arith.maximumf %110, %111 : vector<2x16xf32>
    %cst_62 = arith.constant dense<0.000000e+00> : vector<2xf32>
    %113 = vector.multi_reduction <add>, %112, %cst_62 [1] : vector<2x16xf32> to vector<2xf32>
    %114 = vector.shape_cast %113 : vector<2xf32> to vector<2x1xf32>
    %cst_63 = arith.constant 1.600000e+01 : f32
    %115 = vector.broadcast %cst_63 : f32 to vector<2x1xf32>
    %116 = arith.divf %114, %115 : vector<2x1xf32>
    %c2_64 = arith.constant 2 : index
    %c0_65 = arith.constant 0 : index
    %117 = vector.load %arg6[%c2_64, %c0_65] : memref<10x256xf32, #tpu.memory_space<vmem>>, vector<1x256xf32>
    %118 = vector.broadcast %116 : vector<2x1xf32> to vector<2x256xf32>
    %119 = vector.broadcast %117 : vector<1x256xf32> to vector<2x256xf32>
    %120 = arith.mulf %118, %119 : vector<2x256xf32>
    %121 = arith.addf %96, %120 : vector<2x256xf32>
    %c3_66 = arith.constant 3 : index
    %122 = memref.load %arg7[%c3_66] : memref<33xf32, #tpu.memory_space<smem>>
    %123 = vector.broadcast %122 : f32 to vector<2x16xf32>
    %124 = arith.mulf %123, %40 : vector<2x16xf32>
    %c11 = arith.constant 11 : index
    %125 = memref.load %arg7[%c11] : memref<33xf32, #tpu.memory_space<smem>>
    %126 = vector.broadcast %125 : f32 to vector<2x16xf32>
    %127 = arith.mulf %126, %42 : vector<2x16xf32>
    %128 = arith.addf %124, %127 : vector<2x16xf32>
    %c19 = arith.constant 19 : index
    %129 = memref.load %arg7[%c19] : memref<33xf32, #tpu.memory_space<smem>>
    %130 = vector.broadcast %129 : f32 to vector<2x16xf32>
    %131 = arith.mulf %130, %44 : vector<2x16xf32>
    %132 = arith.addf %128, %131 : vector<2x16xf32>
    %c27 = arith.constant 27 : index
    %133 = memref.load %arg7[%c27] : memref<33xf32, #tpu.memory_space<smem>>
    %134 = vector.broadcast %133 : f32 to vector<2x16xf32>
    %135 = arith.addf %132, %134 : vector<2x16xf32>
    %cst_67 = arith.constant 0.000000e+00 : f32
    %136 = vector.broadcast %cst_67 : f32 to vector<2x16xf32>
    %137 = arith.maximumf %135, %136 : vector<2x16xf32>
    %cst_68 = arith.constant dense<0.000000e+00> : vector<2xf32>
    %138 = vector.multi_reduction <add>, %137, %cst_68 [1] : vector<2x16xf32> to vector<2xf32>
    %139 = vector.shape_cast %138 : vector<2xf32> to vector<2x1xf32>
    %cst_69 = arith.constant 1.600000e+01 : f32
    %140 = vector.broadcast %cst_69 : f32 to vector<2x1xf32>
    %141 = arith.divf %139, %140 : vector<2x1xf32>
    %c3_70 = arith.constant 3 : index
    %c0_71 = arith.constant 0 : index
    %142 = vector.load %arg6[%c3_70, %c0_71] : memref<10x256xf32, #tpu.memory_space<vmem>>, vector<1x256xf32>
    %143 = vector.broadcast %141 : vector<2x1xf32> to vector<2x256xf32>
    %144 = vector.broadcast %142 : vector<1x256xf32> to vector<2x256xf32>
    %145 = arith.mulf %143, %144 : vector<2x256xf32>
    %146 = arith.addf %121, %145 : vector<2x256xf32>
    %c4 = arith.constant 4 : index
    %147 = memref.load %arg7[%c4] : memref<33xf32, #tpu.memory_space<smem>>
    %148 = vector.broadcast %147 : f32 to vector<2x16xf32>
    %149 = arith.mulf %148, %40 : vector<2x16xf32>
    %c12 = arith.constant 12 : index
    %150 = memref.load %arg7[%c12] : memref<33xf32, #tpu.memory_space<smem>>
    %151 = vector.broadcast %150 : f32 to vector<2x16xf32>
    %152 = arith.mulf %151, %42 : vector<2x16xf32>
    %153 = arith.addf %149, %152 : vector<2x16xf32>
    %c20 = arith.constant 20 : index
    %154 = memref.load %arg7[%c20] : memref<33xf32, #tpu.memory_space<smem>>
    %155 = vector.broadcast %154 : f32 to vector<2x16xf32>
    %156 = arith.mulf %155, %44 : vector<2x16xf32>
    %157 = arith.addf %153, %156 : vector<2x16xf32>
    %c28 = arith.constant 28 : index
    %158 = memref.load %arg7[%c28] : memref<33xf32, #tpu.memory_space<smem>>
    %159 = vector.broadcast %158 : f32 to vector<2x16xf32>
    %160 = arith.addf %157, %159 : vector<2x16xf32>
    %cst_72 = arith.constant 0.000000e+00 : f32
    %161 = vector.broadcast %cst_72 : f32 to vector<2x16xf32>
    %162 = arith.maximumf %160, %161 : vector<2x16xf32>
    %cst_73 = arith.constant dense<0.000000e+00> : vector<2xf32>
    %163 = vector.multi_reduction <add>, %162, %cst_73 [1] : vector<2x16xf32> to vector<2xf32>
    %164 = vector.shape_cast %163 : vector<2xf32> to vector<2x1xf32>
    %cst_74 = arith.constant 1.600000e+01 : f32
    %165 = vector.broadcast %cst_74 : f32 to vector<2x1xf32>
    %166 = arith.divf %164, %165 : vector<2x1xf32>
    %c4_75 = arith.constant 4 : index
    %c0_76 = arith.constant 0 : index
    %167 = vector.load %arg6[%c4_75, %c0_76] : memref<10x256xf32, #tpu.memory_space<vmem>>, vector<1x256xf32>
    %168 = vector.broadcast %166 : vector<2x1xf32> to vector<2x256xf32>
    %169 = vector.broadcast %167 : vector<1x256xf32> to vector<2x256xf32>
    %170 = arith.mulf %168, %169 : vector<2x256xf32>
    %171 = arith.addf %146, %170 : vector<2x256xf32>
    %c5 = arith.constant 5 : index
    %172 = memref.load %arg7[%c5] : memref<33xf32, #tpu.memory_space<smem>>
    %173 = vector.broadcast %172 : f32 to vector<2x16xf32>
    %174 = arith.mulf %173, %40 : vector<2x16xf32>
    %c13 = arith.constant 13 : index
    %175 = memref.load %arg7[%c13] : memref<33xf32, #tpu.memory_space<smem>>
    %176 = vector.broadcast %175 : f32 to vector<2x16xf32>
    %177 = arith.mulf %176, %42 : vector<2x16xf32>
    %178 = arith.addf %174, %177 : vector<2x16xf32>
    %c21 = arith.constant 21 : index
    %179 = memref.load %arg7[%c21] : memref<33xf32, #tpu.memory_space<smem>>
    %180 = vector.broadcast %179 : f32 to vector<2x16xf32>
    %181 = arith.mulf %180, %44 : vector<2x16xf32>
    %182 = arith.addf %178, %181 : vector<2x16xf32>
    %c29 = arith.constant 29 : index
    %183 = memref.load %arg7[%c29] : memref<33xf32, #tpu.memory_space<smem>>
    %184 = vector.broadcast %183 : f32 to vector<2x16xf32>
    %185 = arith.addf %182, %184 : vector<2x16xf32>
    %cst_77 = arith.constant 0.000000e+00 : f32
    %186 = vector.broadcast %cst_77 : f32 to vector<2x16xf32>
    %187 = arith.maximumf %185, %186 : vector<2x16xf32>
    %cst_78 = arith.constant dense<0.000000e+00> : vector<2xf32>
    %188 = vector.multi_reduction <add>, %187, %cst_78 [1] : vector<2x16xf32> to vector<2xf32>
    %189 = vector.shape_cast %188 : vector<2xf32> to vector<2x1xf32>
    %cst_79 = arith.constant 1.600000e+01 : f32
    %190 = vector.broadcast %cst_79 : f32 to vector<2x1xf32>
    %191 = arith.divf %189, %190 : vector<2x1xf32>
    %c5_80 = arith.constant 5 : index
    %c0_81 = arith.constant 0 : index
    %192 = vector.load %arg6[%c5_80, %c0_81] : memref<10x256xf32, #tpu.memory_space<vmem>>, vector<1x256xf32>
    %193 = vector.broadcast %191 : vector<2x1xf32> to vector<2x256xf32>
    %194 = vector.broadcast %192 : vector<1x256xf32> to vector<2x256xf32>
    %195 = arith.mulf %193, %194 : vector<2x256xf32>
    %196 = arith.addf %171, %195 : vector<2x256xf32>
    %c6 = arith.constant 6 : index
    %197 = memref.load %arg7[%c6] : memref<33xf32, #tpu.memory_space<smem>>
    %198 = vector.broadcast %197 : f32 to vector<2x16xf32>
    %199 = arith.mulf %198, %40 : vector<2x16xf32>
    %c14 = arith.constant 14 : index
    %200 = memref.load %arg7[%c14] : memref<33xf32, #tpu.memory_space<smem>>
    %201 = vector.broadcast %200 : f32 to vector<2x16xf32>
    %202 = arith.mulf %201, %42 : vector<2x16xf32>
    %203 = arith.addf %199, %202 : vector<2x16xf32>
    %c22 = arith.constant 22 : index
    %204 = memref.load %arg7[%c22] : memref<33xf32, #tpu.memory_space<smem>>
    %205 = vector.broadcast %204 : f32 to vector<2x16xf32>
    %206 = arith.mulf %205, %44 : vector<2x16xf32>
    %207 = arith.addf %203, %206 : vector<2x16xf32>
    %c30 = arith.constant 30 : index
    %208 = memref.load %arg7[%c30] : memref<33xf32, #tpu.memory_space<smem>>
    %209 = vector.broadcast %208 : f32 to vector<2x16xf32>
    %210 = arith.addf %207, %209 : vector<2x16xf32>
    %cst_82 = arith.constant 0.000000e+00 : f32
    %211 = vector.broadcast %cst_82 : f32 to vector<2x16xf32>
    %212 = arith.maximumf %210, %211 : vector<2x16xf32>
    %cst_83 = arith.constant dense<0.000000e+00> : vector<2xf32>
    %213 = vector.multi_reduction <add>, %212, %cst_83 [1] : vector<2x16xf32> to vector<2xf32>
    %214 = vector.shape_cast %213 : vector<2xf32> to vector<2x1xf32>
    %cst_84 = arith.constant 1.600000e+01 : f32
    %215 = vector.broadcast %cst_84 : f32 to vector<2x1xf32>
    %216 = arith.divf %214, %215 : vector<2x1xf32>
    %c6_85 = arith.constant 6 : index
    %c0_86 = arith.constant 0 : index
    %217 = vector.load %arg6[%c6_85, %c0_86] : memref<10x256xf32, #tpu.memory_space<vmem>>, vector<1x256xf32>
    %218 = vector.broadcast %216 : vector<2x1xf32> to vector<2x256xf32>
    %219 = vector.broadcast %217 : vector<1x256xf32> to vector<2x256xf32>
    %220 = arith.mulf %218, %219 : vector<2x256xf32>
    %221 = arith.addf %196, %220 : vector<2x256xf32>
    %c7 = arith.constant 7 : index
    %222 = memref.load %arg7[%c7] : memref<33xf32, #tpu.memory_space<smem>>
    %223 = vector.broadcast %222 : f32 to vector<2x16xf32>
    %224 = arith.mulf %223, %40 : vector<2x16xf32>
    %c15 = arith.constant 15 : index
    %225 = memref.load %arg7[%c15] : memref<33xf32, #tpu.memory_space<smem>>
    %226 = vector.broadcast %225 : f32 to vector<2x16xf32>
    %227 = arith.mulf %226, %42 : vector<2x16xf32>
    %228 = arith.addf %224, %227 : vector<2x16xf32>
    %c23 = arith.constant 23 : index
    %229 = memref.load %arg7[%c23] : memref<33xf32, #tpu.memory_space<smem>>
    %230 = vector.broadcast %229 : f32 to vector<2x16xf32>
    %231 = arith.mulf %230, %44 : vector<2x16xf32>
    %232 = arith.addf %228, %231 : vector<2x16xf32>
    %c31 = arith.constant 31 : index
    %233 = memref.load %arg7[%c31] : memref<33xf32, #tpu.memory_space<smem>>
    %234 = vector.broadcast %233 : f32 to vector<2x16xf32>
    %235 = arith.addf %232, %234 : vector<2x16xf32>
    %cst_87 = arith.constant 0.000000e+00 : f32
    %236 = vector.broadcast %cst_87 : f32 to vector<2x16xf32>
    %237 = arith.maximumf %235, %236 : vector<2x16xf32>
    %cst_88 = arith.constant dense<0.000000e+00> : vector<2xf32>
    %238 = vector.multi_reduction <add>, %237, %cst_88 [1] : vector<2x16xf32> to vector<2xf32>
    %239 = vector.shape_cast %238 : vector<2xf32> to vector<2x1xf32>
    %cst_89 = arith.constant 1.600000e+01 : f32
    %240 = vector.broadcast %cst_89 : f32 to vector<2x1xf32>
    %241 = arith.divf %239, %240 : vector<2x1xf32>
    %c7_90 = arith.constant 7 : index
    %c0_91 = arith.constant 0 : index
    %242 = vector.load %arg6[%c7_90, %c0_91] : memref<10x256xf32, #tpu.memory_space<vmem>>, vector<1x256xf32>
    %243 = vector.broadcast %241 : vector<2x1xf32> to vector<2x256xf32>
    %244 = vector.broadcast %242 : vector<1x256xf32> to vector<2x256xf32>
    %245 = arith.mulf %243, %244 : vector<2x256xf32>
    %246 = arith.addf %221, %245 : vector<2x256xf32>
    %cst_92 = arith.constant 0.000000e+00 : f32
    %247 = vector.broadcast %cst_92 : f32 to vector<2x256xf32>
    %248 = arith.maximumf %246, %247 : vector<2x256xf32>
    %c1_93 = arith.constant 1 : index
    %c0_94 = arith.constant 0 : index
    %249 = vector.load %arg5[%c1_93, %c0_94] : memref<2x512xf32, #tpu.memory_space<vmem>>, vector<1x512xf32>
    %250 = vector.broadcast %249 : vector<1x512xf32> to vector<2x512xf32>
    %251 = arith.mulf %38, %250 : vector<2x512xf32>
    %cst_95 = arith.constant dense<0.000000e+00> : vector<2xf32>
    %252 = vector.multi_reduction <add>, %251, %cst_95 [1] : vector<2x512xf32> to vector<2xf32>
    %253 = vector.shape_cast %252 : vector<2xf32> to vector<2x1xf32>
    %c9_96 = arith.constant 9 : index
    %c0_97 = arith.constant 0 : index
    %254 = vector.load %arg6[%c9_96, %c0_97] : memref<10x256xf32, #tpu.memory_space<vmem>>, vector<1x256xf32>
    %255 = vector.broadcast %254 : vector<1x256xf32> to vector<2x256xf32>
    %256 = arith.mulf %248, %255 : vector<2x256xf32>
    %cst_98 = arith.constant dense<0.000000e+00> : vector<2xf32>
    %257 = vector.multi_reduction <add>, %256, %cst_98 [1] : vector<2x256xf32> to vector<2xf32>
    %258 = vector.shape_cast %257 : vector<2xf32> to vector<2x1xf32>
    %259 = arith.addf %253, %258 : vector<2x1xf32>
    %c32 = arith.constant 32 : index
    %260 = memref.load %arg7[%c32] : memref<33xf32, #tpu.memory_space<smem>>
    %261 = vector.broadcast %260 : f32 to vector<2x1xf32>
    %262 = arith.addf %259, %261 : vector<2x1xf32>
    %263 = math.tanh %262 : vector<2x1xf32>
    %c0_99 = arith.constant 0 : index
    %c0_100 = arith.constant 0 : index
    %264 = vector.load %arg8[%c0_99, %c0_100] : memref<2x1xf32, #tpu.memory_space<vmem>>, vector<2x1xf32>
    tpu.vector_store %arg8[%c0_99, %c0_100], %263 {strides = array<i32>} : memref<2x1xf32, #tpu.memory_space<vmem>>, vector<2x1xf32>,
    return
  }
  func.func @transform_0(%arg0: i32) -> (i32, i32, i32) {
    %c0_i32 = arith.constant 0 : i32
    %c0_i32_0 = arith.constant 0 : i32
    %c0_i32_1 = arith.constant 0 : i32
    %c0_i32_2 = arith.constant 0 : i32
    return %c0_i32, %c0_i32_0, %c0_i32_1 : i32, i32, i32
  }
  func.func @transform_1(%arg0: i32) -> (i32, i32, i32, i32) {
    %c0_i32 = arith.constant 0 : i32
    %c0_i32_0 = arith.constant 0 : i32
    %c0_i32_1 = arith.constant 0 : i32
    %c0_i32_2 = arith.constant 0 : i32
    %c0_i32_3 = arith.constant 0 : i32
    return %c0_i32, %c0_i32_0, %c0_i32_1, %c0_i32_2 : i32, i32, i32, i32
  }
  func.func @transform_2(%arg0: i32) -> (i32, i32, i32) {
    %c0_i32 = arith.constant 0 : i32
    %c0_i32_0 = arith.constant 0 : i32
    %c0_i32_1 = arith.constant 0 : i32
    %c0_i32_2 = arith.constant 0 : i32
    return %c0_i32, %c0_i32_0, %c0_i32_1 : i32, i32, i32
  }
  func.func @transform_3(%arg0: i32) -> (i32, i32, i32) {
    %c0_i32 = arith.constant 0 : i32
    %c0_i32_0 = arith.constant 0 : i32
    %c0_i32_1 = arith.constant 0 : i32
    %c0_i32_2 = arith.constant 0 : i32
    return %c0_i32, %c0_i32_0, %c0_i32_1 : i32, i32, i32
  }
  func.func @transform_4(%arg0: i32) -> (i32, i32) {
    %c0_i32 = arith.constant 0 : i32
    %c0_i32_0 = arith.constant 0 : i32
    %c0_i32_1 = arith.constant 0 : i32
    return %c0_i32, %c0_i32_0 : i32, i32
  }
  func.func @transform_5(%arg0: i32) -> (i32, i32) {
    %c0_i32 = arith.constant 0 : i32
    %c0_i32_0 = arith.constant 0 : i32
    %c0_i32_1 = arith.constant 0 : i32
    return %c0_i32, %c0_i32_0 : i32, i32
  }
  func.func @transform_6(%arg0: i32) -> i32 {
    %c0_i32 = arith.constant 0 : i32
    %c0_i32_0 = arith.constant 0 : i32
    return %c0_i32 : i32
  }
  func.func @transform_7(%arg0: i32) -> (i32, i32) {
    %c0_i32 = arith.constant 0 : i32
    %c0_i32_0 = arith.constant 0 : i32
    %c0_i32_1 = arith.constant 0 : i32
    return %c0_i32, %c0_i32_0 : i32, i32
  }
}

</mosaic_0001>

<llo_original>
// kernel: tpu_custom_call.1
$region0: #{tpu_custom_call.1}
  #allocation0 [shape = 'u32[]', space=smem, size = 0x4, offset = 0x4, fixed_abs, tag = 'smem constant byte address 0x4 - core index']
  #allocation1 [shape = 'u32[144,128]{1,0:T(1,128)}', space=vmem, size = 0x12000, scoped, tag = 'internal scratch']
  %s0 = inlined_call_operand.hbm [shape: f32[2,4,512], index: 0, kind: input, shape index: {}]
  %s1 = inlined_call_operand.hbm [shape: f32[3,2,4,64], index: 1, kind: input, shape index: {}]
  %s2 = inlined_call_operand.hbm [shape: f32[3,2,16], index: 2, kind: input, shape index: {}]
  %s3 = inlined_call_operand.hbm [shape: f32[4,4,512], index: 3, kind: input, shape index: {}]
  %s4 = inlined_call_operand.hbm [shape: f32[2,512], index: 4, kind: input, shape index: {}]
  %s5 = inlined_call_operand.hbm [shape: f32[10,256], index: 5, kind: input, shape index: {}]
  %s6 = inlined_call_operand.vmem [shape: f32[33], index: 6, kind: input, shape index: {}]
  %s7 = inlined_call_operand.vmem [shape: f32[2,1], index: 7, kind: output, shape index: {}]
  %s8 = sld [smem:[#allocation0]]
  $region66: #{tpu_custom_call.1} parent=0
    _
  %s10 = ssub.s32 1, %s8
  %s11 = scalar_select 0, %s10, %s8
  $region1: #{tpu_custom_call.1} parent=0
    #allocation2 [shape = 'u8[16384]{0}', space=vmem, size = 0x4000, scoped, tag = 'input window, operand 0, single buffered']
    #allocation3 [shape = 's32[1]{0}', space=sflag, size = 0x4, scoped, tag = 'scoped memory for tpu_custom_call.1']
    #allocation4 [shape = 's32[1]{0}', space=sflag, size = 0x4, scoped, tag = 'scoped memory for tpu_custom_call.1']
    #allocation5 [shape = 'u8[12288]{0}', space=vmem, size = 0x3000, scoped, tag = 'input window, operand 1, single buffered']
    #allocation6 [shape = 's32[1]{0}', space=sflag, size = 0x4, scoped, tag = 'scoped memory for tpu_custom_call.1']
    #allocation7 [shape = 'u8[3072]{0}', space=vmem, size = 0xc00, scoped, tag = 'input window, operand 2, single buffered']
    #allocation8 [shape = 'u8[32768]{0}', space=vmem, size = 0x8000, scoped, tag = 'input window, operand 3, single buffered']
    #allocation9 [shape = 's32[1]{0}', space=sflag, size = 0x4, scoped, tag = 'scoped memory for tpu_custom_call.1']
    #allocation10 [shape = 'u8[4096]{0}', space=vmem, size = 0x1000, scoped, tag = 'input window, operand 4, single buffered']
    #allocation11 [shape = 'u8[16384]{0}', space=vmem, size = 0x4000, scoped, tag = 'input window, operand 5, single buffered']
    #allocation12 [shape = 's32[1]{0}', space=sflag, size = 0x4, scoped, tag = 'scoped memory for tpu_custom_call.1']
    #allocation13 [shape = 'u8[512]{0}', space=smem, size = 0x200, scoped, tag = 'input window, operand 6, single buffered']
    %12 = vsyncpa [#allocation3], 0
    %13 = vsyncpa [#allocation6], 0
    %14 = vsyncpa [#allocation9], 0
    %15 = vsyncpa [#allocation12], 0
    %16 = vsyncpa [#allocation4], 0
    // Predicated region
    $region2: #{tpu_custom_call.1} parent=1 // pred_check
      _
    $region3: #{tpu_custom_call.1} parent=1 // pred_check_branch
      %18 = sbr.rel (0) target = $region5
    $region4: #{tpu_custom_call.1} parent=1 // pred_region
      %s20 = ssub.s32 512, 512
      %21 = vsyncadd [#allocation3], %s20
      %s22 = sshll.u32 [#allocation2], 4
      %s23 = int_to_ptr.vmem [resolvable:$true] %s22
      %28 = dma.hbm_to_vmem [thread:$0]  %s0, 512, %s23, [#allocation3], 256, 256, 16
    $region5: #{tpu_custom_call.1} parent=1 // pred_fallthru
      _
    // Predicated region
    $region6: #{tpu_custom_call.1} parent=1 // pred_check
      _
    $region7: #{tpu_custom_call.1} parent=1 // pred_check_branch
      %30 = sbr.rel (0) target = $region9
    $region8: #{tpu_custom_call.1} parent=1 // pred_region
      %s32 = ssub.s32 384, 384
      %33 = vsyncadd [#allocation6], %s32
      %s34 = sshll.u32 [#allocation5], 4
      %s35 = int_to_ptr.vmem [resolvable:$true] %s34
      %40 = dma.hbm_to_vmem [thread:$0]  %s1, 384, %s35, [#allocation6], 64, 64, 4
    $region9: #{tpu_custom_call.1} parent=1 // pred_fallthru
      _
    // Predicated region
    $region10: #{tpu_custom_call.1} parent=1 // pred_check
      _
    $region11: #{tpu_custom_call.1} parent=1 // pred_check_branch
      %42 = sbr.rel (0) target = $region13
    $region12: #{tpu_custom_call.1} parent=1 // pred_region
      %s44 = ssub.s32 96, 96
      %45 = vsyncadd [#allocation6], %s44
      %s46 = sshll.u32 [#allocation7], 4
      %s47 = int_to_ptr.vmem [resolvable:$true] %s46
      %52 = dma.hbm_to_vmem [thread:$0]  %s2, 96, %s47, [#allocation6], 32, 32, 2
    $region13: #{tpu_custom_call.1} parent=1 // pred_fallthru
      _
    // Predicated region
    $region14: #{tpu_custom_call.1} parent=1 // pred_check
      _
    $region15: #{tpu_custom_call.1} parent=1 // pred_check_branch
      %54 = sbr.rel (0) target = $region17
    $region16: #{tpu_custom_call.1} parent=1 // pred_region
      %s56 = ssub.s32 1024, 1024
      %57 = vsyncadd [#allocation9], %s56
      %s58 = sshll.u32 [#allocation8], 4
      %s59 = int_to_ptr.vmem [resolvable:$true] %s58
      %64 = dma.hbm_to_vmem [thread:$0]  %s3, 1024, %s59, [#allocation9], 256, 256, 16
    $region17: #{tpu_custom_call.1} parent=1 // pred_fallthru
      _
    // Predicated region
    $region18: #{tpu_custom_call.1} parent=1 // pred_check
      _
    $region19: #{tpu_custom_call.1} parent=1 // pred_check_branch
      %66 = sbr.rel (0) target = $region21
    $region20: #{tpu_custom_call.1} parent=1 // pred_region
      %s68 = ssub.s32 128, 128
      %69 = vsyncadd [#allocation9], %s68
      %s71 = sshll.u32 [#allocation10], 4
      %s72 = int_to_ptr.vmem [resolvable:$true] %s71
      %74 = dma.hbm_to_vmem [thread:$0]  %s4, 128, %s72, [#allocation9]
    $region21: #{tpu_custom_call.1} parent=1 // pred_fallthru
      _
    // Predicated region
    $region22: #{tpu_custom_call.1} parent=1 // pred_check
      _
    $region23: #{tpu_custom_call.1} parent=1 // pred_check_branch
      %76 = sbr.rel (0) target = $region25
    $region24: #{tpu_custom_call.1} parent=1 // pred_region
      %s78 = ssub.s32 512, 512
      %79 = vsyncadd [#allocation12], %s78
      %s80 = sshll.u32 [#allocation11], 4
      %s81 = int_to_ptr.vmem [resolvable:$true] %s80
      %86 = dma.hbm_to_vmem [thread:$0]  %s5, 512, %s81, [#allocation12], 256, 256, 16
    $region25: #{tpu_custom_call.1} parent=1 // pred_fallthru
      _
    // Predicated region
    $region26: #{tpu_custom_call.1} parent=1 // pred_check
      _
    $region27: #{tpu_custom_call.1} parent=1 // pred_check_branch
      %88 = sbr.rel (0) target = $region29
    $region28: #{tpu_custom_call.1} parent=1 // pred_region
      %s90 = ssub.s32 16, 16
      %91 = vsyncadd [#allocation4], %s90
      %s93 = sshll.u32 %s6, 4
      %s94 = int_to_ptr.vmem [resolvable:$true] %s93
      %96 = dma.vmem_to_smem %s94, 16, [#allocation13], [#allocation4]
    $region29: #{tpu_custom_call.1} parent=1 // pred_fallthru
      _
    // Predicated region
    $region30: #{tpu_custom_call.1} parent=1 // pred_check
      _
    $region31: #{tpu_custom_call.1} parent=1 // pred_check_branch
      %98 = sbr.rel (0) target = $region33
    $region32: #{tpu_custom_call.1} parent=1 // pred_region
      %99 = dma.done [#allocation3], 512
    $region33: #{tpu_custom_call.1} parent=1 // pred_fallthru
      _
    // Predicated region
    $region34: #{tpu_custom_call.1} parent=1 // pred_check
      _
    $region35: #{tpu_custom_call.1} parent=1 // pred_check_branch
      %101 = sbr.rel (0) target = $region37
    $region36: #{tpu_custom_call.1} parent=1 // pred_region
      %102 = dma.done [#allocation6], 384
    $region37: #{tpu_custom_call.1} parent=1 // pred_fallthru
      _
    // Predicated region
    $region38: #{tpu_custom_call.1} parent=1 // pred_check
      _
    $region39: #{tpu_custom_call.1} parent=1 // pred_check_branch
      %104 = sbr.rel (0) target = $region41
    $region40: #{tpu_custom_call.1} parent=1 // pred_region
      %105 = dma.done [#allocation6], 96
    $region41: #{tpu_custom_call.1} parent=1 // pred_fallthru
      _
    // Predicated region
    $region42: #{tpu_custom_call.1} parent=1 // pred_check
      _
    $region43: #{tpu_custom_call.1} parent=1 // pred_check_branch
      %107 = sbr.rel (0) target = $region45
    $region44: #{tpu_custom_call.1} parent=1 // pred_region
      %108 = dma.done [#allocation9], 1024
    $region45: #{tpu_custom_call.1} parent=1 // pred_fallthru
      _
    // Predicated region
    $region46: #{tpu_custom_call.1} parent=1 // pred_check
      _
    $region47: #{tpu_custom_call.1} parent=1 // pred_check_branch
      %110 = sbr.rel (0) target = $region49
    $region48: #{tpu_custom_call.1} parent=1 // pred_region
      %111 = dma.done [#allocation9], 128
    $region49: #{tpu_custom_call.1} parent=1 // pred_fallthru
      _
    // Predicated region
    $region50: #{tpu_custom_call.1} parent=1 // pred_check
      _
    $region51: #{tpu_custom_call.1} parent=1 // pred_check_branch
      %113 = sbr.rel (0) target = $region53
    $region52: #{tpu_custom_call.1} parent=1 // pred_region
      %114 = dma.done [#allocation12], 512
    $region53: #{tpu_custom_call.1} parent=1 // pred_fallthru
      _
    // Predicated region
    $region54: #{tpu_custom_call.1} parent=1 // pred_check
      _
    $region55: #{tpu_custom_call.1} parent=1 // pred_check_branch
      %116 = sbr.rel (0) target = $region57
    $region56: #{tpu_custom_call.1} parent=1 // pred_region
      %117 = dma.done [#allocation4], 16
    $region57: #{tpu_custom_call.1} parent=1 // pred_fallthru
      _
    %118 = sfence
    %v119 = vld [vmem:[#allocation10] ss:$2 sm:$0xf]
    %v120 = vld [vmem:[#allocation2] sm:$0xff]
    %v121 = vld [vmem:[#allocation2 + $0x8] sm:$0xff]
    %v122 = vld [vmem:[#allocation2 + $0x10] sm:$0xff]
    %v123 = vld [vmem:[#allocation2 + $0x18] sm:$0xff]
    %v128 = vcombine.high %v120, %v120
    %v129 = vcombine.high %v121, %v121
    %v130 = vcombine.high %v122, %v122
    %v131 = vcombine.high %v123, %v123
    %vm136 = vcmask 1043456
    %v137 = vsel %vm136, %v120, 0.0
    %v138 = vsel %vm136, %v128, 0.0
    %v139 = vadd.f32 %v137, %v138
    %v140 = vsel %vm136, %v121, 0.0
    %v141 = vadd.f32 %v139, %v140
    %v142 = vsel %vm136, %v129, 0.0
    %v143 = vadd.f32 %v141, %v142
    %144 = vadd.xlane.f32.xlu0 %v143
    %v145 = vpop.xlane.xlu0 %144
    %v146 = vsel %vm136, %v122, 0.0
    %v147 = vsel %vm136, %v130, 0.0
    %v148 = vadd.f32 %v146, %v147
    %v149 = vsel %vm136, %v123, 0.0
    %v150 = vadd.f32 %v148, %v149
    %v151 = vsel %vm136, %v131, 0.0
    %v152 = vadd.f32 %v150, %v151
    %153 = vadd.xlane.f32.xlu0 %v152
    %v154 = vpop.xlane.xlu0 %153
    %v155 = vrcp.pop 512.0
    %v156 = vmul.f32 %v145, %v155
    %v157 = vmul.f32 %v154, %v155
    %v158 = vld [vmem:[#allocation8] sm:$0xff]
    %v159 = vld [vmem:[#allocation8 + $0x8] sm:$0xff]
    %v162 = vlaneseq
    %v163 = vand.u32 %v162, 127
    %v164 = vlaneseq
    %v165 = vshrl.u32 %v164, 7
    %v166 = vsub.s32 %v163, %v165
    %v167 = vrot.slane %v156, %v166
    %v168 = vlaneseq
    %v169 = vshrl.u32 %v168, 7
    %v170 = vsub.s32 %v163, %v169
    %v171 = vrot.slane %v157, %v170
    %vm172 = vcmask 1041409
    %v173 = vsel %vm172, %v171, %v167
    %v176 = vcombine.high %v158, %v158
    %v177 = vcombine.high %v159, %v159
    %vm178 = vcmask 31744
    %v179 = vsel %vm178, %v173, 0
    %v181 = vsel %vm136, %v158, 0
    %v183 = vsel %vm136, %v176, 0
    %v185 = vsel %vm136, %v159, 0
    %v187 = vsel %vm136, %v177, 0
    %189 = vmatprep.subr.mxu0 0.0
    %190 = vmatpush1.msra.mxu0 0.0
    %191 = vmatprep.subr.mxu0 0.0
    %192 = vmatpush1.msra.mxu0 0.0
    %193 = vmatprep.subr.mxu0 0.0
    %194 = vmatpush1.msra.mxu0 0.0
    %195 = vmatprep.subr.mxu0 0.0
    %196 = vmatpush1.msra.mxu0 0.0
    %197 = vmatprep.subr.mxu0 0.0
    %198 = vmatpush1.msra.mxu0 0.0
    %199 = vmatprep.subr.mxu0 0.0
    %200 = vmatpush1.msra.mxu0 0.0
    %201 = vmatprep.subr.mxu0 0.0
    %202 = vmatpush1.msra.mxu0 0.0
    %203 = vmatprep.subr.mxu0 0.0
    %204 = vmatpush1.msra.mxu0 0.0
    %205 = vmatprep.subr.mxu0 0.0
    %206 = vmatpush1.msra.mxu0 0.0
    %207 = vmatprep.subr.mxu0 0.0
    %208 = vmatpush1.msra.mxu0 0.0
    %209 = vmatprep.subr.mxu0 0.0
    %210 = vmatpush1.msra.mxu0 0.0
    %211 = vmatprep.subr.mxu0 0.0
    %212 = vmatpush1.msra.mxu0 0.0
    %213 = vmatprep.subr.mxu0 0.0
    %214 = vmatpush1.msra.mxu0 0.0
    %215 = vmatprep.subr.mxu0 0.0
    %216 = vmatpush1.msra.mxu0 0.0
    %217 = vmatprep.subr.mxu0 0.0
    %218 = vmatpush1.msra.mxu0 0.0
    %219 = vmatprep.subr.mxu0 %v183
    %220 = vmatpush1.msra.mxu0 %v181
    %221 = vmatprep.subr.mxu0 0.0
    %222 = vmatpush2.msra.mxu0 0.0
    %223 = vmatprep.subr.mxu0 0.0
    %224 = vmatpush2.msra.mxu0 0.0
    %225 = vmatprep.subr.mxu0 0.0
    %226 = vmatpush2.msra.mxu0 0.0
    %227 = vmatprep.subr.mxu0 0.0
    %228 = vmatpush2.msra.mxu0 0.0
    %229 = vmatprep.subr.mxu0 0.0
    %230 = vmatpush2.msra.mxu0 0.0
    %231 = vmatprep.subr.mxu0 0.0
    %232 = vmatpush2.msra.mxu0 0.0
    %233 = vmatprep.subr.mxu0 0.0
    %234 = vmatpush2.msra.mxu0 0.0
    %235 = vmatprep.subr.mxu0 0.0
    %236 = vmatpush2.msra.mxu0 0.0
    %237 = vmatprep.subr.mxu0 0.0
    %238 = vmatpush2.msra.mxu0 0.0
    %239 = vmatprep.subr.mxu0 0.0
    %240 = vmatpush2.msra.mxu0 0.0
    %241 = vmatprep.subr.mxu0 0.0
    %242 = vmatpush2.msra.mxu0 0.0
    %243 = vmatprep.subr.mxu0 0.0
    %244 = vmatpush2.msra.mxu0 0.0
    %245 = vmatprep.subr.mxu0 0.0
    %246 = vmatpush2.msra.mxu0 0.0
    %247 = vmatprep.subr.mxu0 0.0
    %248 = vmatpush2.msra.mxu0 0.0
    %249 = vmatprep.subr.mxu0 0.0
    %250 = vmatpush2.msra.mxu0 0.0
    %251 = vmatprep.subr.mxu0 0.0
    %252 = vmatpush2.msra.mxu0 0.0
    %253 = vmatprep.mubr.f32.mxu0 0.0
    %254 = vmatmul.mubr.f32.gmra.mxu0 %v179
    %v255 = vpop.f32.mrf.mxu0
    %v256 = vadd.f32 0.0, %v255
    %v257 = vpop.f32.mrf.mxu0
    %v258 = vadd.f32 0.0, %v257
    %259 = vdwg.mxu0
    %260 = vmatprep.subr.mxu0 0.0
    %261 = vmatpush1.msra.mxu0 0.0
    %262 = vmatprep.subr.mxu0 0.0
    %263 = vmatpush1.msra.mxu0 0.0
    %264 = vmatprep.subr.mxu0 0.0
    %265 = vmatpush1.msra.mxu0 0.0
    %266 = vmatprep.subr.mxu0 0.0
    %267 = vmatpush1.msra.mxu0 0.0
    %268 = vmatprep.subr.mxu0 0.0
    %269 = vmatpush1.msra.mxu0 0.0
    %270 = vmatprep.subr.mxu0 0.0
    %271 = vmatpush1.msra.mxu0 0.0
    %272 = vmatprep.subr.mxu0 0.0
    %273 = vmatpush1.msra.mxu0 0.0
    %274 = vmatprep.subr.mxu0 0.0
    %275 = vmatpush1.msra.mxu0 0.0
    %276 = vmatprep.subr.mxu0 0.0
    %277 = vmatpush1.msra.mxu0 0.0
    %278 = vmatprep.subr.mxu0 0.0
    %279 = vmatpush1.msra.mxu0 0.0
    %280 = vmatprep.subr.mxu0 0.0
    %281 = vmatpush1.msra.mxu0 0.0
    %282 = vmatprep.subr.mxu0 0.0
    %283 = vmatpush1.msra.mxu0 0.0
    %284 = vmatprep.subr.mxu0 0.0
    %285 = vmatpush1.msra.mxu0 0.0
    %286 = vmatprep.subr.mxu0 0.0
    %287 = vmatpush1.msra.mxu0 0.0
    %288 = vmatprep.subr.mxu0 0.0
    %289 = vmatpush1.msra.mxu0 0.0
    %290 = vmatprep.subr.mxu0 %v187
    %291 = vmatpush1.msra.mxu0 %v185
    %292 = vmatprep.subr.mxu0 0.0
    %293 = vmatpush2.msra.mxu0 0.0
    %294 = vmatprep.subr.mxu0 0.0
    %295 = vmatpush2.msra.mxu0 0.0
    %296 = vmatprep.subr.mxu0 0.0
    %297 = vmatpush2.msra.mxu0 0.0
    %298 = vmatprep.subr.mxu0 0.0
    %299 = vmatpush2.msra.mxu0 0.0
    %300 = vmatprep.subr.mxu0 0.0
    %301 = vmatpush2.msra.mxu0 0.0
    %302 = vmatprep.subr.mxu0 0.0
    %303 = vmatpush2.msra.mxu0 0.0
    %304 = vmatprep.subr.mxu0 0.0
    %305 = vmatpush2.msra.mxu0 0.0
    %306 = vmatprep.subr.mxu0 0.0
    %307 = vmatpush2.msra.mxu0 0.0
    %308 = vmatprep.subr.mxu0 0.0
    %309 = vmatpush2.msra.mxu0 0.0
    %310 = vmatprep.subr.mxu0 0.0
    %311 = vmatpush2.msra.mxu0 0.0
    %312 = vmatprep.subr.mxu0 0.0
    %313 = vmatpush2.msra.mxu0 0.0
    %314 = vmatprep.subr.mxu0 0.0
    %315 = vmatpush2.msra.mxu0 0.0
    %316 = vmatprep.subr.mxu0 0.0
    %317 = vmatpush2.msra.mxu0 0.0
    %318 = vmatprep.subr.mxu0 0.0
    %319 = vmatpush2.msra.mxu0 0.0
    %320 = vmatprep.subr.mxu0 0.0
    %321 = vmatpush2.msra.mxu0 0.0
    %322 = vmatprep.subr.mxu0 0.0
    %323 = vmatpush2.msra.mxu0 0.0
    %324 = vmatprep.mubr.f32.mxu0 0.0
    %325 = vmatmul.mubr.f32.gmra.mxu0 %v179
    %v326 = vpop.f32.mrf.mxu0
    %v327 = vadd.f32 0.0, %v326
    %v328 = vpop.f32.mrf.mxu0
    %v329 = vadd.f32 0.0, %v328
    %330 = vdwg.mxu0
    %v332 = vlaneseq
    %v333 = vshrl.u32 %v332, 7
    %v334 = vsub.s32 0, %v333
    %v335 = vrot.slane %v119, %v334
    %v336 = vlaneseq
    %v337 = vshrl.u32 %v336, 7
    %v338 = vsub.s32 1, %v337
    %v339 = vrot.slane %v119, %v338
    %v340 = vlaneseq
    %v341 = vshrl.u32 %v340, 7
    %v342 = vsub.s32 2, %v341
    %v343 = vrot.slane %v119, %v342
    %v344 = vlaneseq
    %v345 = vshrl.u32 %v344, 7
    %v346 = vsub.s32 3, %v345
    %v347 = vrot.slane %v119, %v346
    %v352 = vadd.f32 %v335, %v256
    %v353 = vadd.f32 %v339, %v258
    %v354 = vadd.f32 %v343, %v327
    %v355 = vadd.f32 %v347, %v329
    %v356 = vld [vmem:[#allocation5] sm:$0xf]
    %v357 = vld [vmem:[#allocation5 + $0x4] sm:$0xf]
    %vm358 = vcmask 519168
    %v359 = vsel %vm358, %v356, 0.0
    %360 = vadd.xlane.f32.xlu0 %v359
    %v361 = vpop.xlane.xlu0 %360
    %v362 = vsel %vm358, %v357, 0.0
    %363 = vadd.xlane.f32.xlu0 %v362
    %v364 = vpop.xlane.xlu0 %363
    %v365 = vrcp.pop 64.0
    %v366 = vmul.f32 %v361, %v365
    %v367 = vmul.f32 %v364, %v365
    %s368 = scalar_lea.vmem [#allocation8], 16
    %v369 = vld [vmem:[%s368] sm:$0xff]
    %v370 = vld [vmem:[%s368 + $0x8] sm:$0xff]
    %v373 = vlaneseq
    %v374 = vshrl.u32 %v373, 7
    %v375 = vsub.s32 %v163, %v374
    %v376 = vrot.slane %v366, %v375
    %v377 = vlaneseq
    %v378 = vshrl.u32 %v377, 7
    %v379 = vsub.s32 %v163, %v378
    %v380 = vrot.slane %v367, %v379
    %v381 = vsel %vm172, %v380, %v376
    %v384 = vcombine.high %v369, %v369
    %v385 = vcombine.high %v370, %v370
    %v386 = vsel %vm178, %v381, 0
    %v388 = vsel %vm136, %v369, 0
    %v390 = vsel %vm136, %v384, 0
    %v392 = vsel %vm136, %v370, 0
    %v394 = vsel %vm136, %v385, 0
    %396 = vmatprep.subr.mxu0 0.0
    %397 = vmatpush1.msra.mxu0 0.0
    %398 = vmatprep.subr.mxu0 0.0
    %399 = vmatpush1.msra.mxu0 0.0
    %400 = vmatprep.subr.mxu0 0.0
    %401 = vmatpush1.msra.mxu0 0.0
    %402 = vmatprep.subr.mxu0 0.0
    %403 = vmatpush1.msra.mxu0 0.0
    %404 = vmatprep.subr.mxu0 0.0
    %405 = vmatpush1.msra.mxu0 0.0
    %406 = vmatprep.subr.mxu0 0.0
    %407 = vmatpush1.msra.mxu0 0.0
    %408 = vmatprep.subr.mxu0 0.0
    %409 = vmatpush1.msra.mxu0 0.0
    %410 = vmatprep.subr.mxu0 0.0
    %411 = vmatpush1.msra.mxu0 0.0
    %412 = vmatprep.subr.mxu0 0.0
    %413 = vmatpush1.msra.mxu0 0.0
    %414 = vmatprep.subr.mxu0 0.0
    %415 = vmatpush1.msra.mxu0 0.0
    %416 = vmatprep.subr.mxu0 0.0
    %417 = vmatpush1.msra.mxu0 0.0
    %418 = vmatprep.subr.mxu0 0.0
    %419 = vmatpush1.msra.mxu0 0.0
    %420 = vmatprep.subr.mxu0 0.0
    %421 = vmatpush1.msra.mxu0 0.0
    %422 = vmatprep.subr.mxu0 0.0
    %423 = vmatpush1.msra.mxu0 0.0
    %424 = vmatprep.subr.mxu0 0.0
    %425 = vmatpush1.msra.mxu0 0.0
    %426 = vmatprep.subr.mxu0 %v390
    %427 = vmatpush1.msra.mxu0 %v388
    %428 = vmatprep.subr.mxu0 0.0
    %429 = vmatpush2.msra.mxu0 0.0
    %430 = vmatprep.subr.mxu0 0.0
    %431 = vmatpush2.msra.mxu0 0.0
    %432 = vmatprep.subr.mxu0 0.0
    %433 = vmatpush2.msra.mxu0 0.0
    %434 = vmatprep.subr.mxu0 0.0
    %435 = vmatpush2.msra.mxu0 0.0
    %436 = vmatprep.subr.mxu0 0.0
    %437 = vmatpush2.msra.mxu0 0.0
    %438 = vmatprep.subr.mxu0 0.0
    %439 = vmatpush2.msra.mxu0 0.0
    %440 = vmatprep.subr.mxu0 0.0
    %441 = vmatpush2.msra.mxu0 0.0
    %442 = vmatprep.subr.mxu0 0.0
    %443 = vmatpush2.msra.mxu0 0.0
    %444 = vmatprep.subr.mxu0 0.0
    %445 = vmatpush2.msra.mxu0 0.0
    %446 = vmatprep.subr.mxu0 0.0
    %447 = vmatpush2.msra.mxu0 0.0
    %448 = vmatprep.subr.mxu0 0.0
    %449 = vmatpush2.msra.mxu0 0.0
    %450 = vmatprep.subr.mxu0 0.0
    %451 = vmatpush2.msra.mxu0 0.0
    %452 = vmatprep.subr.mxu0 0.0
    %453 = vmatpush2.msra.mxu0 0.0
    %454 = vmatprep.subr.mxu0 0.0
    %455 = vmatpush2.msra.mxu0 0.0
    %456 = vmatprep.subr.mxu0 0.0
    %457 = vmatpush2.msra.mxu0 0.0
    %458 = vmatprep.subr.mxu0 0.0
    %459 = vmatpush2.msra.mxu0 0.0
    %460 = vmatprep.mubr.f32.mxu0 0.0
    %461 = vmatmul.mubr.f32.gmra.mxu0 %v386
    %v462 = vpop.f32.mrf.mxu0
    %v463 = vadd.f32 0.0, %v462
    %v464 = vpop.f32.mrf.mxu0
    %v465 = vadd.f32 0.0, %v464
    %466 = vdwg.mxu0
    %467 = vmatprep.subr.mxu0 0.0
    %468 = vmatpush1.msra.mxu0 0.0
    %469 = vmatprep.subr.mxu0 0.0
    %470 = vmatpush1.msra.mxu0 0.0
    %471 = vmatprep.subr.mxu0 0.0
    %472 = vmatpush1.msra.mxu0 0.0
    %473 = vmatprep.subr.mxu0 0.0
    %474 = vmatpush1.msra.mxu0 0.0
    %475 = vmatprep.subr.mxu0 0.0
    %476 = vmatpush1.msra.mxu0 0.0
    %477 = vmatprep.subr.mxu0 0.0
    %478 = vmatpush1.msra.mxu0 0.0
    %479 = vmatprep.subr.mxu0 0.0
    %480 = vmatpush1.msra.mxu0 0.0
    %481 = vmatprep.subr.mxu0 0.0
    %482 = vmatpush1.msra.mxu0 0.0
    %483 = vmatprep.subr.mxu0 0.0
    %484 = vmatpush1.msra.mxu0 0.0
    %485 = vmatprep.subr.mxu0 0.0
    %486 = vmatpush1.msra.mxu0 0.0
    %487 = vmatprep.subr.mxu0 0.0
    %488 = vmatpush1.msra.mxu0 0.0
    %489 = vmatprep.subr.mxu0 0.0
    %490 = vmatpush1.msra.mxu0 0.0
    %491 = vmatprep.subr.mxu0 0.0
    %492 = vmatpush1.msra.mxu0 0.0
    %493 = vmatprep.subr.mxu0 0.0
    %494 = vmatpush1.msra.mxu0 0.0
    %495 = vmatprep.subr.mxu0 0.0
    %496 = vmatpush1.msra.mxu0 0.0
    %497 = vmatprep.subr.mxu0 %v394
    %498 = vmatpush1.msra.mxu0 %v392
    %499 = vmatprep.subr.mxu0 0.0
    %500 = vmatpush2.msra.mxu0 0.0
    %501 = vmatprep.subr.mxu0 0.0
    %502 = vmatpush2.msra.mxu0 0.0
    %503 = vmatprep.subr.mxu0 0.0
    %504 = vmatpush2.msra.mxu0 0.0
    %505 = vmatprep.subr.mxu0 0.0
    %506 = vmatpush2.msra.mxu0 0.0
    %507 = vmatprep.subr.mxu0 0.0
    %508 = vmatpush2.msra.mxu0 0.0
    %509 = vmatprep.subr.mxu0 0.0
    %510 = vmatpush2.msra.mxu0 0.0
    %511 = vmatprep.subr.mxu0 0.0
    %512 = vmatpush2.msra.mxu0 0.0
    %513 = vmatprep.subr.mxu0 0.0
    %514 = vmatpush2.msra.mxu0 0.0
    %515 = vmatprep.subr.mxu0 0.0
    %516 = vmatpush2.msra.mxu0 0.0
    %517 = vmatprep.subr.mxu0 0.0
    %518 = vmatpush2.msra.mxu0 0.0
    %519 = vmatprep.subr.mxu0 0.0
    %520 = vmatpush2.msra.mxu0 0.0
    %521 = vmatprep.subr.mxu0 0.0
    %522 = vmatpush2.msra.mxu0 0.0
    %523 = vmatprep.subr.mxu0 0.0
    %524 = vmatpush2.msra.mxu0 0.0
    %525 = vmatprep.subr.mxu0 0.0
    %526 = vmatpush2.msra.mxu0 0.0
    %527 = vmatprep.subr.mxu0 0.0
    %528 = vmatpush2.msra.mxu0 0.0
    %529 = vmatprep.subr.mxu0 0.0
    %530 = vmatpush2.msra.mxu0 0.0
    %531 = vmatprep.mubr.f32.mxu0 0.0
    %532 = vmatmul.mubr.f32.gmra.mxu0 %v386
    %v533 = vpop.f32.mrf.mxu0
    %v534 = vadd.f32 0.0, %v533
    %v535 = vpop.f32.mrf.mxu0
    %v536 = vadd.f32 0.0, %v535
    %537 = vdwg.mxu0
    %v538 = vadd.f32 %v352, %v463
    %v539 = vadd.f32 %v353, %v465
    %v540 = vadd.f32 %v354, %v534
    %v541 = vadd.f32 %v355, %v536
    %s542 = scalar_lea.vmem [#allocation5], 8
    %v543 = vld [vmem:[%s542] sm:$0xf]
    %v544 = vld [vmem:[%s542 + $0x4] sm:$0xf]
    %v545 = vsel %vm358, %v543, 0.0
    %546 = vadd.xlane.f32.xlu0 %v545
    %v547 = vpop.xlane.xlu0 %546
    %v548 = vsel %vm358, %v544, 0.0
    %549 = vadd.xlane.f32.xlu0 %v548
    %v550 = vpop.xlane.xlu0 %549
    %v551 = vmul.f32 %v547, %v365
    %v552 = vmul.f32 %v550, %v365
    %s553 = scalar_lea.vmem [#allocation8], 32
    %v554 = vld [vmem:[%s553] sm:$0xff]
    %v555 = vld [vmem:[%s553 + $0x8] sm:$0xff]
    %v558 = vlaneseq
    %v559 = vshrl.u32 %v558, 7
    %v560 = vsub.s32 %v163, %v559
    %v561 = vrot.slane %v551, %v560
    %v562 = vlaneseq
    %v563 = vshrl.u32 %v562, 7
    %v564 = vsub.s32 %v163, %v563
    %v565 = vrot.slane %v552, %v564
    %v566 = vsel %vm172, %v565, %v561
    %v569 = vcombine.high %v554, %v554
    %v570 = vcombine.high %v555, %v555
    %v571 = vsel %vm178, %v566, 0
    %v573 = vsel %vm136, %v554, 0
    %v575 = vsel %vm136, %v569, 0
    %v577 = vsel %vm136, %v555, 0
    %v579 = vsel %vm136, %v570, 0
    %581 = vmatprep.subr.mxu0 0.0
    %582 = vmatpush1.msra.mxu0 0.0
    %583 = vmatprep.subr.mxu0 0.0
    %584 = vmatpush1.msra.mxu0 0.0
    %585 = vmatprep.subr.mxu0 0.0
    %586 = vmatpush1.msra.mxu0 0.0
    %587 = vmatprep.subr.mxu0 0.0
    %588 = vmatpush1.msra.mxu0 0.0
    %589 = vmatprep.subr.mxu0 0.0
    %590 = vmatpush1.msra.mxu0 0.0
    %591 = vmatprep.subr.mxu0 0.0
    %592 = vmatpush1.msra.mxu0 0.0
    %593 = vmatprep.subr.mxu0 0.0
    %594 = vmatpush1.msra.mxu0 0.0
    %595 = vmatprep.subr.mxu0 0.0
    %596 = vmatpush1.msra.mxu0 0.0
    %597 = vmatprep.subr.mxu0 0.0
    %598 = vmatpush1.msra.mxu0 0.0
    %599 = vmatprep.subr.mxu0 0.0
    %600 = vmatpush1.msra.mxu0 0.0
    %601 = vmatprep.subr.mxu0 0.0
    %602 = vmatpush1.msra.mxu0 0.0
    %603 = vmatprep.subr.mxu0 0.0
    %604 = vmatpush1.msra.mxu0 0.0
    %605 = vmatprep.subr.mxu0 0.0
    %606 = vmatpush1.msra.mxu0 0.0
    %607 = vmatprep.subr.mxu0 0.0
    %608 = vmatpush1.msra.mxu0 0.0
    %609 = vmatprep.subr.mxu0 0.0
    %610 = vmatpush1.msra.mxu0 0.0
    %611 = vmatprep.subr.mxu0 %v575
    %612 = vmatpush1.msra.mxu0 %v573
    %613 = vmatprep.subr.mxu0 0.0
    %614 = vmatpush2.msra.mxu0 0.0
    %615 = vmatprep.subr.mxu0 0.0
    %616 = vmatpush2.msra.mxu0 0.0
    %617 = vmatprep.subr.mxu0 0.0
    %618 = vmatpush2.msra.mxu0 0.0
    %619 = vmatprep.subr.mxu0 0.0
    %620 = vmatpush2.msra.mxu0 0.0
    %621 = vmatprep.subr.mxu0 0.0
    %622 = vmatpush2.msra.mxu0 0.0
    %623 = vmatprep.subr.mxu0 0.0
    %624 = vmatpush2.msra.mxu0 0.0
    %625 = vmatprep.subr.mxu0 0.0
    %626 = vmatpush2.msra.mxu0 0.0
    %627 = vmatprep.subr.mxu0 0.0
    %628 = vmatpush2.msra.mxu0 0.0
    %629 = vmatprep.subr.mxu0 0.0
    %630 = vmatpush2.msra.mxu0 0.0
    %631 = vmatprep.subr.mxu0 0.0
    %632 = vmatpush2.msra.mxu0 0.0
    %633 = vmatprep.subr.mxu0 0.0
    %634 = vmatpush2.msra.mxu0 0.0
    %635 = vmatprep.subr.mxu0 0.0
    %636 = vmatpush2.msra.mxu0 0.0
    %637 = vmatprep.subr.mxu0 0.0
    %638 = vmatpush2.msra.mxu0 0.0
    %639 = vmatprep.subr.mxu0 0.0
    %640 = vmatpush2.msra.mxu0 0.0
    %641 = vmatprep.subr.mxu0 0.0
    %642 = vmatpush2.msra.mxu0 0.0
    %643 = vmatprep.subr.mxu0 0.0
    %644 = vmatpush2.msra.mxu0 0.0
    %645 = vmatprep.mubr.f32.mxu0 0.0
    %646 = vmatmul.mubr.f32.gmra.mxu0 %v571
    %v647 = vpop.f32.mrf.mxu0
    %v648 = vadd.f32 0.0, %v647
    %v649 = vpop.f32.mrf.mxu0
    %v650 = vadd.f32 0.0, %v649
    %651 = vdwg.mxu0
    %652 = vmatprep.subr.mxu0 0.0
    %653 = vmatpush1.msra.mxu0 0.0
    %654 = vmatprep.subr.mxu0 0.0
    %655 = vmatpush1.msra.mxu0 0.0
    %656 = vmatprep.subr.mxu0 0.0
    %657 = vmatpush1.msra.mxu0 0.0
    %658 = vmatprep.subr.mxu0 0.0
    %659 = vmatpush1.msra.mxu0 0.0
    %660 = vmatprep.subr.mxu0 0.0
    %661 = vmatpush1.msra.mxu0 0.0
    %662 = vmatprep.subr.mxu0 0.0
    %663 = vmatpush1.msra.mxu0 0.0
    %664 = vmatprep.subr.mxu0 0.0
    %665 = vmatpush1.msra.mxu0 0.0
    %666 = vmatprep.subr.mxu0 0.0
    %667 = vmatpush1.msra.mxu0 0.0
    %668 = vmatprep.subr.mxu0 0.0
    %669 = vmatpush1.msra.mxu0 0.0
    %670 = vmatprep.subr.mxu0 0.0
    %671 = vmatpush1.msra.mxu0 0.0
    %672 = vmatprep.subr.mxu0 0.0
    %673 = vmatpush1.msra.mxu0 0.0
    %674 = vmatprep.subr.mxu0 0.0
    %675 = vmatpush1.msra.mxu0 0.0
    %676 = vmatprep.subr.mxu0 0.0
    %677 = vmatpush1.msra.mxu0 0.0
    %678 = vmatprep.subr.mxu0 0.0
    %679 = vmatpush1.msra.mxu0 0.0
    %680 = vmatprep.subr.mxu0 0.0
    %681 = vmatpush1.msra.mxu0 0.0
    %682 = vmatprep.subr.mxu0 %v579
    %683 = vmatpush1.msra.mxu0 %v577
    %684 = vmatprep.subr.mxu0 0.0
    %685 = vmatpush2.msra.mxu0 0.0
    %686 = vmatprep.subr.mxu0 0.0
    %687 = vmatpush2.msra.mxu0 0.0
    %688 = vmatprep.subr.mxu0 0.0
    %689 = vmatpush2.msra.mxu0 0.0
    %690 = vmatprep.subr.mxu0 0.0
    %691 = vmatpush2.msra.mxu0 0.0
    %692 = vmatprep.subr.mxu0 0.0
    %693 = vmatpush2.msra.mxu0 0.0
    %694 = vmatprep.subr.mxu0 0.0
    %695 = vmatpush2.msra.mxu0 0.0
    %696 = vmatprep.subr.mxu0 0.0
    %697 = vmatpush2.msra.mxu0 0.0
    %698 = vmatprep.subr.mxu0 0.0
    %699 = vmatpush2.msra.mxu0 0.0
    %700 = vmatprep.subr.mxu0 0.0
    %701 = vmatpush2.msra.mxu0 0.0
    %702 = vmatprep.subr.mxu0 0.0
    %703 = vmatpush2.msra.mxu0 0.0
    %704 = vmatprep.subr.mxu0 0.0
    %705 = vmatpush2.msra.mxu0 0.0
    %706 = vmatprep.subr.mxu0 0.0
    %707 = vmatpush2.msra.mxu0 0.0
    %708 = vmatprep.subr.mxu0 0.0
    %709 = vmatpush2.msra.mxu0 0.0
    %710 = vmatprep.subr.mxu0 0.0
    %711 = vmatpush2.msra.mxu0 0.0
    %712 = vmatprep.subr.mxu0 0.0
    %713 = vmatpush2.msra.mxu0 0.0
    %714 = vmatprep.subr.mxu0 0.0
    %715 = vmatpush2.msra.mxu0 0.0
    %716 = vmatprep.mubr.f32.mxu0 0.0
    %717 = vmatmul.mubr.f32.gmra.mxu0 %v571
    %v718 = vpop.f32.mrf.mxu0
    %v719 = vadd.f32 0.0, %v718
    %v720 = vpop.f32.mrf.mxu0
    %v721 = vadd.f32 0.0, %v720
    %722 = vdwg.mxu0
    %v723 = vadd.f32 %v538, %v648
    %v724 = vadd.f32 %v539, %v650
    %v725 = vadd.f32 %v540, %v719
    %v726 = vadd.f32 %v541, %v721
    %s727 = scalar_lea.vmem [#allocation5], 16
    %v728 = vld [vmem:[%s727] sm:$0xf]
    %v729 = vld [vmem:[%s727 + $0x4] sm:$0xf]
    %v730 = vsel %vm358, %v728, 0.0
    %731 = vadd.xlane.f32.xlu0 %v730
    %v732 = vpop.xlane.xlu0 %731
    %v733 = vsel %vm358, %v729, 0.0
    %734 = vadd.xlane.f32.xlu0 %v733
    %v735 = vpop.xlane.xlu0 %734
    %v736 = vmul.f32 %v732, %v365
    %v737 = vmul.f32 %v735, %v365
    %s738 = scalar_lea.vmem [#allocation8], 48
    %v739 = vld [vmem:[%s738] sm:$0xff]
    %v740 = vld [vmem:[%s738 + $0x8] sm:$0xff]
    %v743 = vlaneseq
    %v744 = vshrl.u32 %v743, 7
    %v745 = vsub.s32 %v163, %v744
    %v746 = vrot.slane %v736, %v745
    %v747 = vlaneseq
    %v748 = vshrl.u32 %v747, 7
    %v749 = vsub.s32 %v163, %v748
    %v750 = vrot.slane %v737, %v749
    %v751 = vsel %vm172, %v750, %v746
    %v754 = vcombine.high %v739, %v739
    %v755 = vcombine.high %v740, %v740
    %v756 = vsel %vm178, %v751, 0
    %v758 = vsel %vm136, %v739, 0
    %v760 = vsel %vm136, %v754, 0
    %v762 = vsel %vm136, %v740, 0
    %v764 = vsel %vm136, %v755, 0
    %766 = vmatprep.subr.mxu0 0.0
    %767 = vmatpush1.msra.mxu0 0.0
    %768 = vmatprep.subr.mxu0 0.0
    %769 = vmatpush1.msra.mxu0 0.0
    %770 = vmatprep.subr.mxu0 0.0
    %771 = vmatpush1.msra.mxu0 0.0
    %772 = vmatprep.subr.mxu0 0.0
    %773 = vmatpush1.msra.mxu0 0.0
    %774 = vmatprep.subr.mxu0 0.0
    %775 = vmatpush1.msra.mxu0 0.0
    %776 = vmatprep.subr.mxu0 0.0
    %777 = vmatpush1.msra.mxu0 0.0
    %778 = vmatprep.subr.mxu0 0.0
    %779 = vmatpush1.msra.mxu0 0.0
    %780 = vmatprep.subr.mxu0 0.0
    %781 = vmatpush1.msra.mxu0 0.0
    %782 = vmatprep.subr.mxu0 0.0
    %783 = vmatpush1.msra.mxu0 0.0
    %784 = vmatprep.subr.mxu0 0.0
    %785 = vmatpush1.msra.mxu0 0.0
    %786 = vmatprep.subr.mxu0 0.0
    %787 = vmatpush1.msra.mxu0 0.0
    %788 = vmatprep.subr.mxu0 0.0
    %789 = vmatpush1.msra.mxu0 0.0
    %790 = vmatprep.subr.mxu0 0.0
    %791 = vmatpush1.msra.mxu0 0.0
    %792 = vmatprep.subr.mxu0 0.0
    %793 = vmatpush1.msra.mxu0 0.0
    %794 = vmatprep.subr.mxu0 0.0
    %795 = vmatpush1.msra.mxu0 0.0
    %796 = vmatprep.subr.mxu0 %v760
    %797 = vmatpush1.msra.mxu0 %v758
    %798 = vmatprep.subr.mxu0 0.0
    %799 = vmatpush2.msra.mxu0 0.0
    %800 = vmatprep.subr.mxu0 0.0
    %801 = vmatpush2.msra.mxu0 0.0
    %802 = vmatprep.subr.mxu0 0.0
    %803 = vmatpush2.msra.mxu0 0.0
    %804 = vmatprep.subr.mxu0 0.0
    %805 = vmatpush2.msra.mxu0 0.0
    %806 = vmatprep.subr.mxu0 0.0
    %807 = vmatpush2.msra.mxu0 0.0
    %808 = vmatprep.subr.mxu0 0.0
    %809 = vmatpush2.msra.mxu0 0.0
    %810 = vmatprep.subr.mxu0 0.0
    %811 = vmatpush2.msra.mxu0 0.0
    %812 = vmatprep.subr.mxu0 0.0
    %813 = vmatpush2.msra.mxu0 0.0
    %814 = vmatprep.subr.mxu0 0.0
    %815 = vmatpush2.msra.mxu0 0.0
    %816 = vmatprep.subr.mxu0 0.0
    %817 = vmatpush2.msra.mxu0 0.0
    %818 = vmatprep.subr.mxu0 0.0
    %819 = vmatpush2.msra.mxu0 0.0
    %820 = vmatprep.subr.mxu0 0.0
    %821 = vmatpush2.msra.mxu0 0.0
    %822 = vmatprep.subr.mxu0 0.0
    %823 = vmatpush2.msra.mxu0 0.0
    %824 = vmatprep.subr.mxu0 0.0
    %825 = vmatpush2.msra.mxu0 0.0
    %826 = vmatprep.subr.mxu0 0.0
    %827 = vmatpush2.msra.mxu0 0.0
    %828 = vmatprep.subr.mxu0 0.0
    %829 = vmatpush2.msra.mxu0 0.0
    %830 = vmatprep.mubr.f32.mxu0 0.0
    %831 = vmatmul.mubr.f32.gmra.mxu0 %v756
    %v832 = vpop.f32.mrf.mxu0
    %v833 = vadd.f32 0.0, %v832
    %v834 = vpop.f32.mrf.mxu0
    %v835 = vadd.f32 0.0, %v834
    %836 = vdwg.mxu0
    %837 = vmatprep.subr.mxu0 0.0
    %838 = vmatpush1.msra.mxu0 0.0
    %839 = vmatprep.subr.mxu0 0.0
    %840 = vmatpush1.msra.mxu0 0.0
    %841 = vmatprep.subr.mxu0 0.0
    %842 = vmatpush1.msra.mxu0 0.0
    %843 = vmatprep.subr.mxu0 0.0
    %844 = vmatpush1.msra.mxu0 0.0
    %845 = vmatprep.subr.mxu0 0.0
    %846 = vmatpush1.msra.mxu0 0.0
    %847 = vmatprep.subr.mxu0 0.0
    %848 = vmatpush1.msra.mxu0 0.0
    %849 = vmatprep.subr.mxu0 0.0
    %850 = vmatpush1.msra.mxu0 0.0
    %851 = vmatprep.subr.mxu0 0.0
    %852 = vmatpush1.msra.mxu0 0.0
    %853 = vmatprep.subr.mxu0 0.0
    %854 = vmatpush1.msra.mxu0 0.0
    %855 = vmatprep.subr.mxu0 0.0
    %856 = vmatpush1.msra.mxu0 0.0
    %857 = vmatprep.subr.mxu0 0.0
    %858 = vmatpush1.msra.mxu0 0.0
    %859 = vmatprep.subr.mxu0 0.0
    %860 = vmatpush1.msra.mxu0 0.0
    %861 = vmatprep.subr.mxu0 0.0
    %862 = vmatpush1.msra.mxu0 0.0
    %863 = vmatprep.subr.mxu0 0.0
    %864 = vmatpush1.msra.mxu0 0.0
    %865 = vmatprep.subr.mxu0 0.0
    %866 = vmatpush1.msra.mxu0 0.0
    %867 = vmatprep.subr.mxu0 %v764
    %868 = vmatpush1.msra.mxu0 %v762
    %869 = vmatprep.subr.mxu0 0.0
    %870 = vmatpush2.msra.mxu0 0.0
    %871 = vmatprep.subr.mxu0 0.0
    %872 = vmatpush2.msra.mxu0 0.0
    %873 = vmatprep.subr.mxu0 0.0
    %874 = vmatpush2.msra.mxu0 0.0
    %875 = vmatprep.subr.mxu0 0.0
    %876 = vmatpush2.msra.mxu0 0.0
    %877 = vmatprep.subr.mxu0 0.0
    %878 = vmatpush2.msra.mxu0 0.0
    %879 = vmatprep.subr.mxu0 0.0
    %880 = vmatpush2.msra.mxu0 0.0
    %881 = vmatprep.subr.mxu0 0.0
    %882 = vmatpush2.msra.mxu0 0.0
    %883 = vmatprep.subr.mxu0 0.0
    %884 = vmatpush2.msra.mxu0 0.0
    %885 = vmatprep.subr.mxu0 0.0
    %886 = vmatpush2.msra.mxu0 0.0
    %887 = vmatprep.subr.mxu0 0.0
    %888 = vmatpush2.msra.mxu0 0.0
    %889 = vmatprep.subr.mxu0 0.0
    %890 = vmatpush2.msra.mxu0 0.0
    %891 = vmatprep.subr.mxu0 0.0
    %892 = vmatpush2.msra.mxu0 0.0
    %893 = vmatprep.subr.mxu0 0.0
    %894 = vmatpush2.msra.mxu0 0.0
    %895 = vmatprep.subr.mxu0 0.0
    %896 = vmatpush2.msra.mxu0 0.0
    %897 = vmatprep.subr.mxu0 0.0
    %898 = vmatpush2.msra.mxu0 0.0
    %899 = vmatprep.subr.mxu0 0.0
    %900 = vmatpush2.msra.mxu0 0.0
    %901 = vmatprep.mubr.f32.mxu0 0.0
    %902 = vmatmul.mubr.f32.gmra.mxu0 %v756
    %v903 = vpop.f32.mrf.mxu0
    %v904 = vadd.f32 0.0, %v903
    %v905 = vpop.f32.mrf.mxu0
    %v906 = vadd.f32 0.0, %v905
    %907 = vdwg.mxu0
    %v908 = vadd.f32 %v723, %v833
    %v909 = vadd.f32 %v724, %v835
    %v910 = vadd.f32 %v725, %v904
    %v911 = vadd.f32 %v726, %v906
    %v912 = vmax.f32 %v908, 0.0
    %v913 = vmax.f32 %v909, 0.0
    %v914 = vmax.f32 %v910, 0.0
    %v915 = vmax.f32 %v911, 0.0
    %v916 = vld [vmem:[#allocation7] sm:$0x3]
    %s917 = scalar_lea.vmem [#allocation7], 2
    %v918 = vld [vmem:[%s917] sm:$0x3]
    %s919 = scalar_lea.vmem [#allocation7], 4
    %v920 = vld [vmem:[%s919] sm:$0x3]
    %s921 = scalar_lea.vmem [#allocation11], 16
    %v922 = vld [vmem:[%s921] ss:$8 sm:$0x3]
    %s923 = sld [smem:[#allocation13]]
    %v924 = vstv %s923
    %v925 = vmul.f32 %v924, %v916
    %s926 = sld [smem:[#allocation13 + $0x8]]
    %v927 = vstv %s926
    %v928 = vmul.f32 %v927, %v918
    %v929 = vadd.f32 %v925, %v928
    %s930 = sld [smem:[#allocation13 + $0x10]]
    %v931 = vstv %s930
    %v932 = vmul.f32 %v931, %v920
    %v933 = vadd.f32 %v929, %v932
    %s934 = sld [smem:[#allocation13 + $0x18]]
    %v935 = vstv %s934
    %v936 = vadd.f32 %v933, %v935
    %v937 = vmax.f32 %v936, 0.0
    %vm938 = vcmask 123904
    %v939 = vsel %vm938, %v937, 0.0
    %940 = vadd.xlane.f32.xlu0 %v939
    %v941 = vpop.xlane.xlu0 %940
    %v942 = vrcp.pop 16.0
    %v943 = vmul.f32 %v941, %v942
    %v944 = vld [vmem:[#allocation11] ss:$8 sm:$0x3]
    %v946 = vlaneseq
    %v947 = vshrl.u32 %v946, 7
    %v948 = vsub.s32 0, %v947
    %v949 = vrot.slane %v944, %v948
    %v950 = vlaneseq
    %v951 = vshrl.u32 %v950, 7
    %v952 = vsub.s32 1, %v951
    %v953 = vrot.slane %v944, %v952
    %v956 = vmul.f32 %v943, %v949
    %v957 = vmul.f32 %v943, %v953
    %v959 = vlaneseq
    %v960 = vshrl.u32 %v959, 7
    %v961 = vsub.s32 0, %v960
    %v962 = vrot.slane %v922, %v961
    %v963 = vlaneseq
    %v964 = vshrl.u32 %v963, 7
    %v965 = vsub.s32 1, %v964
    %v966 = vrot.slane %v922, %v965
    %v969 = vadd.f32 %v962, %v956
    %v970 = vadd.f32 %v966, %v957
    %s971 = sld [smem:[#allocation13 + $0x1]]
    %v972 = vstv %s971
    %v973 = vmul.f32 %v972, %v916
    %s974 = sld [smem:[#allocation13 + $0x9]]
    %v975 = vstv %s974
    %v976 = vmul.f32 %v975, %v918
    %v977 = vadd.f32 %v973, %v976
    %s978 = sld [smem:[#allocation13 + $0x11]]
    %v979 = vstv %s978
    %v980 = vmul.f32 %v979, %v920
    %v981 = vadd.f32 %v977, %v980
    %s982 = sld [smem:[#allocation13 + $0x19]]
    %v983 = vstv %s982
    %v984 = vadd.f32 %v981, %v983
    %v985 = vmax.f32 %v984, 0.0
    %v986 = vsel %vm938, %v985, 0.0
    %987 = vadd.xlane.f32.xlu0 %v986
    %v988 = vpop.xlane.xlu0 %987
    %v989 = vmul.f32 %v988, %v942
    %s990 = scalar_lea.vmem [#allocation11], 1
    %v991 = vld [vmem:[%s990] ss:$8 sm:$0x3]
    %v993 = vlaneseq
    %v994 = vshrl.u32 %v993, 7
    %v995 = vsub.s32 0, %v994
    %v996 = vrot.slane %v991, %v995
    %v997 = vlaneseq
    %v998 = vshrl.u32 %v997, 7
    %v999 = vsub.s32 1, %v998
    %v1000 = vrot.slane %v991, %v999
    %v1003 = vmul.f32 %v989, %v996
    %v1004 = vmul.f32 %v989, %v1000
    %v1005 = vadd.f32 %v969, %v1003
    %v1006 = vadd.f32 %v970, %v1004
    %s1007 = sld [smem:[#allocation13 + $0x2]]
    %v1008 = vstv %s1007
    %v1009 = vmul.f32 %v1008, %v916
    %s1010 = sld [smem:[#allocation13 + $0xa]]
    %v1011 = vstv %s1010
    %v1012 = vmul.f32 %v1011, %v918
    %v1013 = vadd.f32 %v1009, %v1012
    %s1014 = sld [smem:[#allocation13 + $0x12]]
    %v1015 = vstv %s1014
    %v1016 = vmul.f32 %v1015, %v920
    %v1017 = vadd.f32 %v1013, %v1016
    %s1018 = sld [smem:[#allocation13 + $0x1a]]
    %v1019 = vstv %s1018
    %v1020 = vadd.f32 %v1017, %v1019
    %v1021 = vmax.f32 %v1020, 0.0
    %v1022 = vsel %vm938, %v1021, 0.0
    %1023 = vadd.xlane.f32.xlu0 %v1022
    %v1024 = vpop.xlane.xlu0 %1023
    %v1025 = vmul.f32 %v1024, %v942
    %s1026 = scalar_lea.vmem [#allocation11], 2
    %v1027 = vld [vmem:[%s1026] ss:$8 sm:$0x3]
    %v1029 = vlaneseq
    %v1030 = vshrl.u32 %v1029, 7
    %v1031 = vsub.s32 0, %v1030
    %v1032 = vrot.slane %v1027, %v1031
    %v1033 = vlaneseq
    %v1034 = vshrl.u32 %v1033, 7
    %v1035 = vsub.s32 1, %v1034
    %v1036 = vrot.slane %v1027, %v1035
    %v1039 = vmul.f32 %v1025, %v1032
    %v1040 = vmul.f32 %v1025, %v1036
    %v1041 = vadd.f32 %v1005, %v1039
    %v1042 = vadd.f32 %v1006, %v1040
    %s1043 = sld [smem:[#allocation13 + $0x3]]
    %v1044 = vstv %s1043
    %v1045 = vmul.f32 %v1044, %v916
    %s1046 = sld [smem:[#allocation13 + $0xb]]
    %v1047 = vstv %s1046
    %v1048 = vmul.f32 %v1047, %v918
    %v1049 = vadd.f32 %v1045, %v1048
    %s1050 = sld [smem:[#allocation13 + $0x13]]
    %v1051 = vstv %s1050
    %v1052 = vmul.f32 %v1051, %v920
    %v1053 = vadd.f32 %v1049, %v1052
    %s1054 = sld [smem:[#allocation13 + $0x1b]]
    %v1055 = vstv %s1054
    %v1056 = vadd.f32 %v1053, %v1055
    %v1057 = vmax.f32 %v1056, 0.0
    %v1058 = vsel %vm938, %v1057, 0.0
    %1059 = vadd.xlane.f32.xlu0 %v1058
    %v1060 = vpop.xlane.xlu0 %1059
    %v1061 = vmul.f32 %v1060, %v942
    %s1062 = scalar_lea.vmem [#allocation11], 3
    %v1063 = vld [vmem:[%s1062] ss:$8 sm:$0x3]
    %v1065 = vlaneseq
    %v1066 = vshrl.u32 %v1065, 7
    %v1067 = vsub.s32 0, %v1066
    %v1068 = vrot.slane %v1063, %v1067
    %v1069 = vlaneseq
    %v1070 = vshrl.u32 %v1069, 7
    %v1071 = vsub.s32 1, %v1070
    %v1072 = vrot.slane %v1063, %v1071
    %v1075 = vmul.f32 %v1061, %v1068
    %v1076 = vmul.f32 %v1061, %v1072
    %v1077 = vadd.f32 %v1041, %v1075
    %v1078 = vadd.f32 %v1042, %v1076
    %s1079 = sld [smem:[#allocation13 + $0x4]]
    %v1080 = vstv %s1079
    %v1081 = vmul.f32 %v1080, %v916
    %s1082 = sld [smem:[#allocation13 + $0xc]]
    %v1083 = vstv %s1082
    %v1084 = vmul.f32 %v1083, %v918
    %v1085 = vadd.f32 %v1081, %v1084
    %s1086 = sld [smem:[#allocation13 + $0x14]]
    %v1087 = vstv %s1086
    %v1088 = vmul.f32 %v1087, %v920
    %v1089 = vadd.f32 %v1085, %v1088
    %s1090 = sld [smem:[#allocation13 + $0x1c]]
    %v1091 = vstv %s1090
    %v1092 = vadd.f32 %v1089, %v1091
    %v1093 = vmax.f32 %v1092, 0.0
    %v1094 = vsel %vm938, %v1093, 0.0
    %1095 = vadd.xlane.f32.xlu0 %v1094
    %v1096 = vpop.xlane.xlu0 %1095
    %v1097 = vmul.f32 %v1096, %v942
    %s1098 = scalar_lea.vmem [#allocation11], 4
    %v1099 = vld [vmem:[%s1098] ss:$8 sm:$0x3]
    %v1101 = vlaneseq
    %v1102 = vshrl.u32 %v1101, 7
    %v1103 = vsub.s32 0, %v1102
    %v1104 = vrot.slane %v1099, %v1103
    %v1105 = vlaneseq
    %v1106 = vshrl.u32 %v1105, 7
    %v1107 = vsub.s32 1, %v1106
    %v1108 = vrot.slane %v1099, %v1107
    %v1111 = vmul.f32 %v1097, %v1104
    %v1112 = vmul.f32 %v1097, %v1108
    %v1113 = vadd.f32 %v1077, %v1111
    %v1114 = vadd.f32 %v1078, %v1112
    %s1115 = sld [smem:[#allocation13 + $0x5]]
    %v1116 = vstv %s1115
    %v1117 = vmul.f32 %v1116, %v916
    %s1118 = sld [smem:[#allocation13 + $0xd]]
    %v1119 = vstv %s1118
    %v1120 = vmul.f32 %v1119, %v918
    %v1121 = vadd.f32 %v1117, %v1120
    %s1122 = sld [smem:[#allocation13 + $0x15]]
    %v1123 = vstv %s1122
    %v1124 = vmul.f32 %v1123, %v920
    %v1125 = vadd.f32 %v1121, %v1124
    %s1126 = sld [smem:[#allocation13 + $0x1d]]
    %v1127 = vstv %s1126
    %v1128 = vadd.f32 %v1125, %v1127
    %v1129 = vmax.f32 %v1128, 0.0
    %v1130 = vsel %vm938, %v1129, 0.0
    %1131 = vadd.xlane.f32.xlu0 %v1130
    %v1132 = vpop.xlane.xlu0 %1131
    %v1133 = vmul.f32 %v1132, %v942
    %s1134 = scalar_lea.vmem [#allocation11], 5
    %v1135 = vld [vmem:[%s1134] ss:$8 sm:$0x3]
    %v1137 = vlaneseq
    %v1138 = vshrl.u32 %v1137, 7
    %v1139 = vsub.s32 0, %v1138
    %v1140 = vrot.slane %v1135, %v1139
    %v1141 = vlaneseq
    %v1142 = vshrl.u32 %v1141, 7
    %v1143 = vsub.s32 1, %v1142
    %v1144 = vrot.slane %v1135, %v1143
    %v1147 = vmul.f32 %v1133, %v1140
    %v1148 = vmul.f32 %v1133, %v1144
    %v1149 = vadd.f32 %v1113, %v1147
    %v1150 = vadd.f32 %v1114, %v1148
    %s1151 = sld [smem:[#allocation13 + $0x6]]
    %v1152 = vstv %s1151
    %v1153 = vmul.f32 %v1152, %v916
    %s1154 = sld [smem:[#allocation13 + $0xe]]
    %v1155 = vstv %s1154
    %v1156 = vmul.f32 %v1155, %v918
    %v1157 = vadd.f32 %v1153, %v1156
    %s1158 = sld [smem:[#allocation13 + $0x16]]
    %v1159 = vstv %s1158
    %v1160 = vmul.f32 %v1159, %v920
    %v1161 = vadd.f32 %v1157, %v1160
    %s1162 = sld [smem:[#allocation13 + $0x1e]]
    %v1163 = vstv %s1162
    %v1164 = vadd.f32 %v1161, %v1163
    %v1165 = vmax.f32 %v1164, 0.0
    %v1166 = vsel %vm938, %v1165, 0.0
    %1167 = vadd.xlane.f32.xlu0 %v1166
    %v1168 = vpop.xlane.xlu0 %1167
    %v1169 = vmul.f32 %v1168, %v942
    %s1170 = scalar_lea.vmem [#allocation11], 6
    %v1171 = vld [vmem:[%s1170] ss:$8 sm:$0x3]
    %v1173 = vlaneseq
    %v1174 = vshrl.u32 %v1173, 7
    %v1175 = vsub.s32 0, %v1174
    %v1176 = vrot.slane %v1171, %v1175
    %v1177 = vlaneseq
    %v1178 = vshrl.u32 %v1177, 7
    %v1179 = vsub.s32 1, %v1178
    %v1180 = vrot.slane %v1171, %v1179
    %v1183 = vmul.f32 %v1169, %v1176
    %v1184 = vmul.f32 %v1169, %v1180
    %v1185 = vadd.f32 %v1149, %v1183
    %v1186 = vadd.f32 %v1150, %v1184
    %s1187 = sld [smem:[#allocation13 + $0x7]]
    %v1188 = vstv %s1187
    %v1189 = vmul.f32 %v1188, %v916
    %s1190 = sld [smem:[#allocation13 + $0xf]]
    %v1191 = vstv %s1190
    %v1192 = vmul.f32 %v1191, %v918
    %v1193 = vadd.f32 %v1189, %v1192
    %s1194 = sld [smem:[#allocation13 + $0x17]]
    %v1195 = vstv %s1194
    %v1196 = vmul.f32 %v1195, %v920
    %v1197 = vadd.f32 %v1193, %v1196
    %s1198 = sld [smem:[#allocation13 + $0x1f]]
    %v1199 = vstv %s1198
    %v1200 = vadd.f32 %v1197, %v1199
    %v1201 = vmax.f32 %v1200, 0.0
    %v1202 = vsel %vm938, %v1201, 0.0
    %1203 = vadd.xlane.f32.xlu0 %v1202
    %v1204 = vpop.xlane.xlu0 %1203
    %v1205 = vmul.f32 %v1204, %v942
    %s1206 = scalar_lea.vmem [#allocation11], 7
    %v1207 = vld [vmem:[%s1206] ss:$8 sm:$0x3]
    %v1209 = vlaneseq
    %v1210 = vshrl.u32 %v1209, 7
    %v1211 = vsub.s32 0, %v1210
    %v1212 = vrot.slane %v1207, %v1211
    %v1213 = vlaneseq
    %v1214 = vshrl.u32 %v1213, 7
    %v1215 = vsub.s32 1, %v1214
    %v1216 = vrot.slane %v1207, %v1215
    %v1219 = vmul.f32 %v1205, %v1212
    %v1220 = vmul.f32 %v1205, %v1216
    %v1221 = vadd.f32 %v1185, %v1219
    %v1222 = vadd.f32 %v1186, %v1220
    %v1223 = vmax.f32 %v1221, 0.0
    %v1224 = vmax.f32 %v1222, 0.0
    %s1225 = scalar_lea.vmem [#allocation10], 1
    %v1226 = vld [vmem:[%s1225] ss:$2 sm:$0xf]
    %v1228 = vlaneseq
    %v1229 = vshrl.u32 %v1228, 7
    %v1230 = vsub.s32 0, %v1229
    %v1231 = vrot.slane %v1226, %v1230
    %v1232 = vlaneseq
    %v1233 = vshrl.u32 %v1232, 7
    %v1234 = vsub.s32 1, %v1233
    %v1235 = vrot.slane %v1226, %v1234
    %v1236 = vlaneseq
    %v1237 = vshrl.u32 %v1236, 7
    %v1238 = vsub.s32 2, %v1237
    %v1239 = vrot.slane %v1226, %v1238
    %v1240 = vlaneseq
    %v1241 = vshrl.u32 %v1240, 7
    %v1242 = vsub.s32 3, %v1241
    %v1243 = vrot.slane %v1226, %v1242
    %v1248 = vmul.f32 %v912, %v1231
    %v1249 = vmul.f32 %v913, %v1235
    %v1250 = vmul.f32 %v914, %v1239
    %v1251 = vmul.f32 %v915, %v1243
    %vm1252 = vcmask 1041408
    %v1253 = vsel %vm1252, %v1248, 0.0
    %v1254 = vsel %vm1252, %v1249, 0.0
    %v1255 = vadd.f32 %v1253, %v1254
    %v1256 = vsel %vm1252, %v1250, 0.0
    %v1257 = vadd.f32 %v1255, %v1256
    %v1258 = vsel %vm1252, %v1251, 0.0
    %v1259 = vadd.f32 %v1257, %v1258
    %1260 = vadd.xlane.f32.xlu0 %v1259
    %v1261 = vpop.xlane.xlu0 %1260
    %s1262 = scalar_lea.vmem [#allocation11], 17
    %v1263 = vld [vmem:[%s1262] ss:$8 sm:$0x3]
    %v1265 = vlaneseq
    %v1266 = vshrl.u32 %v1265, 7
    %v1267 = vsub.s32 0, %v1266
    %v1268 = vrot.slane %v1263, %v1267
    %v1269 = vlaneseq
    %v1270 = vshrl.u32 %v1269, 7
    %v1271 = vsub.s32 1, %v1270
    %v1272 = vrot.slane %v1263, %v1271
    %v1275 = vmul.f32 %v1223, %v1268
    %v1276 = vmul.f32 %v1224, %v1272
    %v1277 = vsel %vm1252, %v1275, 0.0
    %v1278 = vsel %vm1252, %v1276, 0.0
    %v1279 = vadd.f32 %v1277, %v1278
    %1280 = vadd.xlane.f32.xlu0 %v1279
    %v1281 = vpop.xlane.xlu0 %1280
    %v1282 = vadd.f32 %v1261, %v1281
    %s1283 = sld [smem:[#allocation13 + $0x20]]
    %v1284 = vstv %s1283
    %v1285 = vadd.f32 %v1282, %v1284
    %v1286 = vtanh.pop %v1285
    %vm1287 = vcmask 1024
    %1288 = vst.msk [vmem:[%s7] sm:$0x3] %vm1287, %v1286
    // Predicated region
    $region58: #{tpu_custom_call.1} parent=1 // pred_check
      _
    $region59: #{tpu_custom_call.1} parent=1 // pred_check_branch
      %1290 = sbr.rel (0) target = $region61
    $region60: #{tpu_custom_call.1} parent=1 // pred_region
      _
    $region61: #{tpu_custom_call.1} parent=1 // pred_fallthru
      _
    // Predicated region
    $region62: #{tpu_custom_call.1} parent=1 // pred_check
      _
    $region63: #{tpu_custom_call.1} parent=1 // pred_check_branch
      %1292 = sbr.rel (0) target = $region65
    $region64: #{tpu_custom_call.1} parent=1 // pred_region
      _
    $region65: #{tpu_custom_call.1} parent=1 // pred_fallthru
      _
    %1293 = vsyncpa [#allocation3], 1
    %1294 = vsyncpa [#allocation6], 1
    %1295 = vsyncpa [#allocation9], 1
    %1296 = vsyncpa [#allocation12], 1
    %1297 = vsyncpa [#allocation4], 1

</llo_original>
